<compile_context>
chip_gen: v7x
topology: tpu7x:2x2x1
jax: 0.10.0
libtpu: 0.0.40
codegen_flags: <defaults>
</compile_context>

<pallas_src>
import math

import jax
import jax.numpy as jnp
from jax.experimental import pallas as pl
from jax.experimental.pallas import tpu as pltpu

NUM_HEADS = 2
LN_EPS = 1e-5
MASK_NEG = -1e9


# --------------------------- parameter repacking -----------------------------

def _prepare_kernel_params(params):
    """Convert PyTorch-layout params into packed, pre-transposed kernel arrays."""
    L = len(params)
    E = params[0]["out_w"].shape[0]
    F = params[0]["lin1_w"].shape[0]
    W = max(3 * E, F, E)                       # packed-vector row width

    def pad_row(v):
        v = v.reshape(1, -1).astype(jnp.float32)
        return jnp.pad(v, ((0, 0), (0, W - v.shape[1])))

    wqkv, wo, w1, w2, vec_rows = [], [], [], [], []
    for p in params:
        wqkv.append(p["in_w"].T)               # (E, 3E): fused QKV, pre-transposed
        wo.append(p["out_w"].T)                # (E, E)
        w1.append(p["lin1_w"].T)               # (E, F)
        w2.append(p["lin2_w"].T)               # (F, E)
        vec_rows += [
            pad_row(p["in_b"]),    # row 0: fused QKV bias      (3E used)
            pad_row(p["lin1_b"]),  # row 1: FFN first bias      (F used)
            pad_row(p["out_b"]),   # row 2: out_proj bias       (E used)
            pad_row(p["lin2_b"]),  # row 3: FFN second bias     (E used)
            pad_row(p["ln1_w"]),   # row 4: LayerNorm1 weight
            pad_row(p["ln1_b"]),   # row 5: LayerNorm1 bias
            pad_row(p["ln2_w"]),   # row 6: LayerNorm2 weight
            pad_row(p["ln2_b"]),   # row 7: LayerNorm2 bias
        ]
    return {
        "num_layers": L,
        "wqkv": jnp.stack(wqkv, axis=0),            # (L, E, 3E)
        "wo":   jnp.stack(wo, axis=0),              # (L, E, E)
        "w1":   jnp.stack(w1, axis=0),              # (L, E, F)
        "w2":   jnp.stack(w2, axis=0),              # (L, F, E)
        "vecs": jnp.concatenate(vec_rows, axis=0),  # (L*8, W)
    }


# ------------------------------- Pallas kernel --------------------------------

def _run_encoder(x, mask_bias, kp):
    B, S, E = x.shape
    L = kp["num_layers"]
    H = NUM_HEADS
    hd = E // H
    F = kp["w1"].shape[-1]
    scale = 1.0 / math.sqrt(hd)

    x_flat = x.reshape(B * S, E)

    def kernel(x_ref, mask_ref, wqkv_ref, wo_ref, w1_ref, w2_ref, vecs_ref, o_ref):
        h = x_ref[...]                           # (B*S, E) f32, resident across layers
        vv = vecs_ref[...]                       # (L*8, W) packed small vectors
        m = mask_ref[...]                        # (B, S): 0.0 keep / -1e9 padded key
        # Hoisted: broadcast the per-batch key-padding mask to (S, S) ONCE.
        masks = [jnp.broadcast_to(m[b:b + 1, :], (S, S)) for b in range(B)]

        def layer_norm(z, w, b):
            mu = jnp.mean(z, axis=-1, keepdims=True)
            var = jnp.mean(jnp.square(z - mu), axis=-1, keepdims=True)
            return (z - mu) * jax.lax.rsqrt(var + LN_EPS) * w + b

        for l in range(L):                       # both layers fused, unrolled
            r = l * 8
            bqkv = vv[r + 0:r + 1, :3 * E]       # (1, 3E)
            b1 = vv[r + 1:r + 2, :F]
            out_b = vv[r + 2:r + 3, :E]
            lin2_b = vv[r + 3:r + 4, :E]
            ln1_w, ln1_b = vv[r + 4:r + 5, :E], vv[r + 5:r + 6, :E]
            ln2_w, ln2_b = vv[r + 6:r + 7, :E], vv[r + 7:r + 8, :E]

            # ---- fused QKV projection: one (B*S, E) @ (E, 3E) matmul --------
            qkv = jnp.dot(h, wqkv_ref[l], preferred_element_type=jnp.float32) + bqkv

            # ---- per-head / per-batch attention on tiny aligned tiles -------
            head_outs = []
            for hh in range(H):
                q_h = qkv[:, hh * hd:(hh + 1) * hd] * scale          # (B*S, hd)
                k_h = qkv[:, E + hh * hd:E + (hh + 1) * hd]
                v_h = qkv[:, 2 * E + hh * hd:2 * E + (hh + 1) * hd]
                outs = []
                for b in range(B):               # static, sublane-aligned slices
                    qb = q_h[b * S:(b + 1) * S, :]
                    kb = k_h[b * S:(b + 1) * S, :]
                    vb = v_h[b * S:(b + 1) * S, :]
                    # q @ k^T without an in-kernel transpose (contract last dims).
                    s = jax.lax.dot_general(qb, kb, (((1,), (1,)), ((), ())),
                                            preferred_element_type=jnp.float32)
                    s = s + masks[b]
                    s = s - jnp.max(s, axis=-1, keepdims=True)
                    p = jnp.exp(s)
                    inv = pl.reciprocal(jnp.sum(p, axis=-1, keepdims=True),
                                        approx=False)
                    outs.append(jnp.dot(p * inv, vb,
                                        preferred_element_type=jnp.float32))
                head_outs.append(jnp.concatenate(outs, axis=0))      # (B*S, hd)
            # Static lane concat of heads -> one (E, E) output projection.
            attn = jnp.concatenate(head_outs, axis=-1)               # (B*S, E)
            attn = jnp.dot(attn, wo_ref[l], preferred_element_type=jnp.float32) + out_b

            # ---- add & LayerNorm 1 (post-norm) ------------------------------
            h1 = layer_norm(h + attn, ln1_w, ln1_b)

            # ---- feed-forward (ReLU) ----------------------------------------
            ff = jnp.dot(h1, w1_ref[l], preferred_element_type=jnp.float32) + b1
            ff = jnp.maximum(ff, 0.0)
            ff = jnp.dot(ff, w2_ref[l], preferred_element_type=jnp.float32) + lin2_b

            # ---- add & LayerNorm 2 ------------------------------------------
            h = layer_norm(h1 + ff, ln2_w, ln2_b)

        o_ref[...] = h.astype(o_ref.dtype)

    vmem_spec = pl.BlockSpec(memory_space=pltpu.MemorySpace.VMEM)
    out_flat = pl.pallas_call(
        kernel,
        out_shape=jax.ShapeDtypeStruct((B * S, E), x.dtype),
        in_specs=[vmem_spec] * 7,
        out_specs=vmem_spec,
    )(x_flat, mask_bias, kp["wqkv"], kp["wo"], kp["w1"], kp["w2"], kp["vecs"])
    return out_flat.reshape(B, S, E)


def self_attention_forward(x, params, padding_mask=None):
    """Equivalent of SelfAttention.forward (dropout = identity)."""
    B, S, _ = x.shape
    if padding_mask is None:
        mask_bias = jnp.zeros((B, S), jnp.float32)
    else:
        mask_bias = jnp.where(padding_mask, MASK_NEG, 0.0).astype(jnp.float32)
        mask_bias = mask_bias.reshape(B, S)
    kp = _prepare_kernel_params(params)
    return _run_encoder(x, mask_bias, kp)


# ------------------------ parameter init + reference -------------------------

def init_params(key, embed_dim, ff_dim, num_layers=2):
    params = []
    for _ in range(num_layers):
        keys = jax.random.split(key, 12)
        key = keys[0]
        p = {
            "in_w": 0.05 * jax.random.normal(keys[1], (3 * embed_dim, embed_dim), jnp.float32),
            "in_b": 0.05 * jax.random.normal(keys[2], (1, 3 * embed_dim), jnp.float32),
            "out_w": 0.05 * jax.random.normal(keys[3], (embed_dim, embed_dim), jnp.float32),
            "out_b": 0.05 * jax.random.normal(keys[4], (1, embed_dim), jnp.float32),
            "ln1_w": 1.0 + 0.05 * jax.random.normal(keys[5], (1, embed_dim), jnp.float32),
            "ln1_b": 0.05 * jax.random.normal(keys[6], (1, embed_dim), jnp.float32),
            "lin1_w": 0.05 * jax.random.normal(keys[7], (ff_dim, embed_dim), jnp.float32),
            "lin1_b": 0.05 * jax.random.normal(keys[8], (1, ff_dim), jnp.float32),
            "lin2_w": 0.05 * jax.random.normal(keys[9], (embed_dim, ff_dim), jnp.float32),
            "lin2_b": 0.05 * jax.random.normal(keys[10], (1, embed_dim), jnp.float32),
            "ln2_w": 1.0 + 0.05 * jax.random.normal(keys[11], (1, embed_dim), jnp.float32),
            "ln2_b": jnp.zeros((1, embed_dim), jnp.float32),
        }
        params.append(p)
    return params


def _reference_forward(x, params, padding_mask=None):
    """Pure-JAX reference of the PyTorch post-norm TransformerEncoder."""
    B, S, E = x.shape
    hd = E // NUM_HEADS
    if padding_mask is None:
        mask_bias = jnp.zeros((B, 1, 1, S), jnp.float32)
    else:
        mask_bias = jnp.where(padding_mask, MASK_NEG, 0.0).reshape(B, 1, 1, S)

    def ln(h, w, b):
        mu = jnp.mean(h, axis=-1, keepdims=True)
        var = jnp.mean(jnp.square(h - mu), axis=-1, keepdims=True)
        return (h - mu) * jax.lax.rsqrt(var + LN_EPS) * w + b

    out = x
    for p in params:
        qkv = out @ p["in_w"].T + p["in_b"][0]
        q, k, v = jnp.split(qkv, 3, axis=-1)
        q = q.reshape(B, S, NUM_HEADS, hd).transpose(0, 2, 1, 3) / math.sqrt(hd)
        k = k.reshape(B, S, NUM_HEADS, hd).transpose(0, 2, 1, 3)
        v = v.reshape(B, S, NUM_HEADS, hd).transpose(0, 2, 1, 3)
        s = jnp.einsum("bhqd,bhkd->bhqk", q, k) + mask_bias
        p_attn = jax.nn.softmax(s, axis=-1)
        a = jnp.einsum("bhqk,bhkd->bhqd", p_attn, v)
        a = a.transpose(0, 2, 1, 3).reshape(B, S, E)
        a = a @ p["out_w"].T + p["out_b"][0]
        h1 = ln(out + a, p["ln1_w"][0], p["ln1_b"][0])
        ff = jnp.maximum(h1 @ p["lin1_w"].T + p["lin1_b"][0], 0.0)
        ff = ff @ p["lin2_w"].T + p["lin2_b"][0]
        out = ln(h1 + ff, p["ln2_w"][0], p["ln2_b"][0])
    return out


if __name__ == "__main__":
    B, S, E, FF = 2, 8, 32, 64          # batch, seq, embed_dim, ff_dim

    key = jax.random.PRNGKey(0)
    k_x, k_p = jax.random.split(key)
    x = jax.random.normal(k_x, (B, S, E), jnp.float32)
    params = init_params(k_p, E, FF, num_layers=2)

    # branch 1: no padding mask
    out = self_attention_forward(x, params, padding_mask=None)
    out = jax.block_until_ready(out)
    ref = _reference_forward(x, params, padding_mask=None)
    assert out.shape == (B, S, E)
    assert float(jnp.max(jnp.abs(out - ref))) < 1e-4

    # branch 2: with src_key_padding_mask (True = padded)
    padding_mask = jnp.zeros((B, S), bool).at[1, S - 2:].set(True)
    out_m = self_attention_forward(x, params, padding_mask=padding_mask)
    out_m = jax.block_until_ready(out_m)
    ref_m = _reference_forward(x, params, padding_mask=padding_mask)
    assert float(jnp.max(jnp.abs(out_m - ref_m))) < 1e-4

    print("KERNEL_OK")
</pallas_src>

<mosaic_0001>
module attributes {stable_mosaic.version = 11 : i64} {
  func.func @kernel(%arg0: memref<16x32xf32, #tpu.memory_space<vmem>>, %arg1: memref<2x8xf32, #tpu.memory_space<vmem>>, %arg2: memref<2x32x96xf32, #tpu.memory_space<vmem>>, %arg3: memref<2x32x32xf32, #tpu.memory_space<vmem>>, %arg4: memref<2x32x64xf32, #tpu.memory_space<vmem>>, %arg5: memref<2x64x32xf32, #tpu.memory_space<vmem>>, %arg6: memref<16x96xf32, #tpu.memory_space<vmem>>, %arg7: memref<16x32xf32, #tpu.memory_space<vmem>>) attributes {dimension_semantics = [], scalar_prefetch = 0 : i64, scratch_operands = 0 : i64, tpu.core_type = #tpu.core_type<tc>} {
    %c0 = arith.constant 0 : index
    %c0_0 = arith.constant 0 : index
    %0 = vector.load %arg0[%c0, %c0_0] : memref<16x32xf32, #tpu.memory_space<vmem>>, vector<16x32xf32>
    %c0_1 = arith.constant 0 : index
    %c0_2 = arith.constant 0 : index
    %1 = vector.load %arg6[%c0_1, %c0_2] : memref<16x96xf32, #tpu.memory_space<vmem>>, vector<16x96xf32>
    %c0_3 = arith.constant 0 : index
    %c0_4 = arith.constant 0 : index
    %2 = vector.load %arg1[%c0_3, %c0_4] : memref<2x8xf32, #tpu.memory_space<vmem>>, vector<2x8xf32>
    %3 = vector.extract_strided_slice %2 {offsets = [0, 0], sizes = [1, 8], strides = [1, 1]} : vector<2x8xf32> to vector<1x8xf32>
    %4 = vector.shape_cast %3 : vector<1x8xf32> to vector<1x8xf32>
    %5 = vector.broadcast %4 : vector<1x8xf32> to vector<8x8xf32>
    %6 = vector.extract_strided_slice %2 {offsets = [1, 0], sizes = [1, 8], strides = [1, 1]} : vector<2x8xf32> to vector<1x8xf32>
    %7 = vector.shape_cast %6 : vector<1x8xf32> to vector<1x8xf32>
    %8 = vector.broadcast %7 : vector<1x8xf32> to vector<8x8xf32>
    %9 = vector.extract_strided_slice %1 {offsets = [0, 0], sizes = [1, 96], strides = [1, 1]} : vector<16x96xf32> to vector<1x96xf32>
    %10 = vector.extract_strided_slice %1 {offsets = [1, 0], sizes = [1, 64], strides = [1, 1]} : vector<16x96xf32> to vector<1x64xf32>
    %11 = vector.extract_strided_slice %1 {offsets = [2, 0], sizes = [1, 32], strides = [1, 1]} : vector<16x96xf32> to vector<1x32xf32>
    %12 = vector.extract_strided_slice %1 {offsets = [3, 0], sizes = [1, 32], strides = [1, 1]} : vector<16x96xf32> to vector<1x32xf32>
    %13 = vector.extract_strided_slice %1 {offsets = [4, 0], sizes = [1, 32], strides = [1, 1]} : vector<16x96xf32> to vector<1x32xf32>
    %14 = vector.extract_strided_slice %1 {offsets = [5, 0], sizes = [1, 32], strides = [1, 1]} : vector<16x96xf32> to vector<1x32xf32>
    %15 = vector.extract_strided_slice %1 {offsets = [6, 0], sizes = [1, 32], strides = [1, 1]} : vector<16x96xf32> to vector<1x32xf32>
    %16 = vector.extract_strided_slice %1 {offsets = [7, 0], sizes = [1, 32], strides = [1, 1]} : vector<16x96xf32> to vector<1x32xf32>
    %c0_5 = arith.constant 0 : index
    %c0_6 = arith.constant 0 : index
    %c0_7 = arith.constant 0 : index
    %17 = vector.load %arg2[%c0_5, %c0_6, %c0_7] : memref<2x32x96xf32, #tpu.memory_space<vmem>>, vector<1x32x96xf32>
    %18 = vector.shape_cast %17 : vector<1x32x96xf32> to vector<32x96xf32>
    %cst = arith.constant dense<0.000000e+00> : vector<16x96xf32>
    %19 = tpu.matmul %0, %18, %cst {dimension_numbers = #tpu.dot_dimension_numbers<[1], [0], [0], [1], [0, 0, 1, 1], [], []>} : vector<16x32xf32>, vector<32x96xf32>, vector<16x96xf32> -> vector<16x96xf32>
    %20 = vector.broadcast %9 : vector<1x96xf32> to vector<16x96xf32>
    %21 = arith.addf %19, %20 : vector<16x96xf32>
    %22 = vector.extract_strided_slice %21 {offsets = [0, 0], sizes = [16, 16], strides = [1, 1]} : vector<16x96xf32> to vector<16x16xf32>
    %cst_8 = arith.constant 2.500000e-01 : f32
    %23 = vector.broadcast %cst_8 : f32 to vector<16x16xf32>
    %24 = arith.mulf %22, %23 : vector<16x16xf32>
    %25 = vector.extract_strided_slice %21 {offsets = [0, 32], sizes = [16, 16], strides = [1, 1]} : vector<16x96xf32> to vector<16x16xf32>
    %26 = vector.extract_strided_slice %21 {offsets = [0, 64], sizes = [16, 16], strides = [1, 1]} : vector<16x96xf32> to vector<16x16xf32>
    %27 = vector.extract_strided_slice %24 {offsets = [0, 0], sizes = [8, 16], strides = [1, 1]} : vector<16x16xf32> to vector<8x16xf32>
    %28 = vector.extract_strided_slice %25 {offsets = [0, 0], sizes = [8, 16], strides = [1, 1]} : vector<16x16xf32> to vector<8x16xf32>
    %29 = vector.extract_strided_slice %26 {offsets = [0, 0], sizes = [8, 16], strides = [1, 1]} : vector<16x16xf32> to vector<8x16xf32>
    %cst_9 = arith.constant dense<0.000000e+00> : vector<8x8xf32>
    %30 = tpu.matmul %27, %28, %cst_9 {dimension_numbers = #tpu.dot_dimension_numbers<[1], [1], [0], [0], [0, 0, 1, 0], [], []>} : vector<8x16xf32>, vector<8x16xf32>, vector<8x8xf32> -> vector<8x8xf32>
    %31 = arith.addf %30, %5 : vector<8x8xf32>
    %cst_10 = arith.constant dense<0xFF800000> : vector<8xf32>
    %32 = vector.multi_reduction <maximumf>, %31, %cst_10 [1] : vector<8x8xf32> to vector<8xf32>
    %33 = vector.shape_cast %32 : vector<8xf32> to vector<8x1xf32>
    %34 = vector.broadcast %33 : vector<8x1xf32> to vector<8x8xf32>
    %35 = arith.subf %31, %34 : vector<8x8xf32>
    %36 = math.exp %35 : vector<8x8xf32>
    %cst_11 = arith.constant dense<0.000000e+00> : vector<8xf32>
    %37 = vector.multi_reduction <add>, %36, %cst_11 [1] : vector<8x8xf32> to vector<8xf32>
    %38 = vector.shape_cast %37 : vector<8xf32> to vector<8x1xf32>
    %39 = tpu.reciprocal %38 : vector<8x1xf32> -> vector<8x1xf32>
    %40 = vector.broadcast %39 : vector<8x1xf32> to vector<8x8xf32>
    %41 = arith.mulf %36, %40 : vector<8x8xf32>
    %cst_12 = arith.constant dense<0.000000e+00> : vector<8x16xf32>
    %42 = tpu.matmul %41, %29, %cst_12 {dimension_numbers = #tpu.dot_dimension_numbers<[1], [0], [0], [1], [0, 0, 1, 1], [], []>} : vector<8x8xf32>, vector<8x16xf32>, vector<8x16xf32> -> vector<8x16xf32>
    %43 = vector.extract_strided_slice %24 {offsets = [8, 0], sizes = [8, 16], strides = [1, 1]} : vector<16x16xf32> to vector<8x16xf32>
    %44 = vector.extract_strided_slice %25 {offsets = [8, 0], sizes = [8, 16], strides = [1, 1]} : vector<16x16xf32> to vector<8x16xf32>
    %45 = vector.extract_strided_slice %26 {offsets = [8, 0], sizes = [8, 16], strides = [1, 1]} : vector<16x16xf32> to vector<8x16xf32>
    %cst_13 = arith.constant dense<0.000000e+00> : vector<8x8xf32>
    %46 = tpu.matmul %43, %44, %cst_13 {dimension_numbers = #tpu.dot_dimension_numbers<[1], [1], [0], [0], [0, 0, 1, 0], [], []>} : vector<8x16xf32>, vector<8x16xf32>, vector<8x8xf32> -> vector<8x8xf32>
    %47 = arith.addf %46, %8 : vector<8x8xf32>
    %cst_14 = arith.constant dense<0xFF800000> : vector<8xf32>
    %48 = vector.multi_reduction <maximumf>, %47, %cst_14 [1] : vector<8x8xf32> to vector<8xf32>
    %49 = vector.shape_cast %48 : vector<8xf32> to vector<8x1xf32>
    %50 = vector.broadcast %49 : vector<8x1xf32> to vector<8x8xf32>
    %51 = arith.subf %47, %50 : vector<8x8xf32>
    %52 = math.exp %51 : vector<8x8xf32>
    %cst_15 = arith.constant dense<0.000000e+00> : vector<8xf32>
    %53 = vector.multi_reduction <add>, %52, %cst_15 [1] : vector<8x8xf32> to vector<8xf32>
    %54 = vector.shape_cast %53 : vector<8xf32> to vector<8x1xf32>
    %55 = tpu.reciprocal %54 : vector<8x1xf32> -> vector<8x1xf32>
    %56 = vector.broadcast %55 : vector<8x1xf32> to vector<8x8xf32>
    %57 = arith.mulf %52, %56 : vector<8x8xf32>
    %cst_16 = arith.constant dense<0.000000e+00> : vector<8x16xf32>
    %58 = tpu.matmul %57, %45, %cst_16 {dimension_numbers = #tpu.dot_dimension_numbers<[1], [0], [0], [1], [0, 0, 1, 1], [], []>} : vector<8x8xf32>, vector<8x16xf32>, vector<8x16xf32> -> vector<8x16xf32>
    %59 = tpu.concatenate %42, %58 in 0 : vector<8x16xf32>, vector<8x16xf32> -> vector<16x16xf32>
    %60 = vector.extract_strided_slice %21 {offsets = [0, 16], sizes = [16, 16], strides = [1, 1]} : vector<16x96xf32> to vector<16x16xf32>
    %cst_17 = arith.constant 2.500000e-01 : f32
    %61 = vector.broadcast %cst_17 : f32 to vector<16x16xf32>
    %62 = arith.mulf %60, %61 : vector<16x16xf32>
    %63 = vector.extract_strided_slice %21 {offsets = [0, 48], sizes = [16, 16], strides = [1, 1]} : vector<16x96xf32> to vector<16x16xf32>
    %64 = vector.extract_strided_slice %21 {offsets = [0, 80], sizes = [16, 16], strides = [1, 1]} : vector<16x96xf32> to vector<16x16xf32>
    %65 = vector.extract_strided_slice %62 {offsets = [0, 0], sizes = [8, 16], strides = [1, 1]} : vector<16x16xf32> to vector<8x16xf32>
    %66 = vector.extract_strided_slice %63 {offsets = [0, 0], sizes = [8, 16], strides = [1, 1]} : vector<16x16xf32> to vector<8x16xf32>
    %67 = vector.extract_strided_slice %64 {offsets = [0, 0], sizes = [8, 16], strides = [1, 1]} : vector<16x16xf32> to vector<8x16xf32>
    %cst_18 = arith.constant dense<0.000000e+00> : vector<8x8xf32>
    %68 = tpu.matmul %65, %66, %cst_18 {dimension_numbers = #tpu.dot_dimension_numbers<[1], [1], [0], [0], [0, 0, 1, 0], [], []>} : vector<8x16xf32>, vector<8x16xf32>, vector<8x8xf32> -> vector<8x8xf32>
    %69 = arith.addf %68, %5 : vector<8x8xf32>
    %cst_19 = arith.constant dense<0xFF800000> : vector<8xf32>
    %70 = vector.multi_reduction <maximumf>, %69, %cst_19 [1] : vector<8x8xf32> to vector<8xf32>
    %71 = vector.shape_cast %70 : vector<8xf32> to vector<8x1xf32>
    %72 = vector.broadcast %71 : vector<8x1xf32> to vector<8x8xf32>
    %73 = arith.subf %69, %72 : vector<8x8xf32>
    %74 = math.exp %73 : vector<8x8xf32>
    %cst_20 = arith.constant dense<0.000000e+00> : vector<8xf32>
    %75 = vector.multi_reduction <add>, %74, %cst_20 [1] : vector<8x8xf32> to vector<8xf32>
    %76 = vector.shape_cast %75 : vector<8xf32> to vector<8x1xf32>
    %77 = tpu.reciprocal %76 : vector<8x1xf32> -> vector<8x1xf32>
    %78 = vector.broadcast %77 : vector<8x1xf32> to vector<8x8xf32>
    %79 = arith.mulf %74, %78 : vector<8x8xf32>
    %cst_21 = arith.constant dense<0.000000e+00> : vector<8x16xf32>
    %80 = tpu.matmul %79, %67, %cst_21 {dimension_numbers = #tpu.dot_dimension_numbers<[1], [0], [0], [1], [0, 0, 1, 1], [], []>} : vector<8x8xf32>, vector<8x16xf32>, vector<8x16xf32> -> vector<8x16xf32>
    %81 = vector.extract_strided_slice %62 {offsets = [8, 0], sizes = [8, 16], strides = [1, 1]} : vector<16x16xf32> to vector<8x16xf32>
    %82 = vector.extract_strided_slice %63 {offsets = [8, 0], sizes = [8, 16], strides = [1, 1]} : vector<16x16xf32> to vector<8x16xf32>
    %83 = vector.extract_strided_slice %64 {offsets = [8, 0], sizes = [8, 16], strides = [1, 1]} : vector<16x16xf32> to vector<8x16xf32>
    %cst_22 = arith.constant dense<0.000000e+00> : vector<8x8xf32>
    %84 = tpu.matmul %81, %82, %cst_22 {dimension_numbers = #tpu.dot_dimension_numbers<[1], [1], [0], [0], [0, 0, 1, 0], [], []>} : vector<8x16xf32>, vector<8x16xf32>, vector<8x8xf32> -> vector<8x8xf32>
    %85 = arith.addf %84, %8 : vector<8x8xf32>
    %cst_23 = arith.constant dense<0xFF800000> : vector<8xf32>
    %86 = vector.multi_reduction <maximumf>, %85, %cst_23 [1] : vector<8x8xf32> to vector<8xf32>
    %87 = vector.shape_cast %86 : vector<8xf32> to vector<8x1xf32>
    %88 = vector.broadcast %87 : vector<8x1xf32> to vector<8x8xf32>
    %89 = arith.subf %85, %88 : vector<8x8xf32>
    %90 = math.exp %89 : vector<8x8xf32>
    %cst_24 = arith.constant dense<0.000000e+00> : vector<8xf32>
    %91 = vector.multi_reduction <add>, %90, %cst_24 [1] : vector<8x8xf32> to vector<8xf32>
    %92 = vector.shape_cast %91 : vector<8xf32> to vector<8x1xf32>
    %93 = tpu.reciprocal %92 : vector<8x1xf32> -> vector<8x1xf32>
    %94 = vector.broadcast %93 : vector<8x1xf32> to vector<8x8xf32>
    %95 = arith.mulf %90, %94 : vector<8x8xf32>
    %cst_25 = arith.constant dense<0.000000e+00> : vector<8x16xf32>
    %96 = tpu.matmul %95, %83, %cst_25 {dimension_numbers = #tpu.dot_dimension_numbers<[1], [0], [0], [1], [0, 0, 1, 1], [], []>} : vector<8x8xf32>, vector<8x16xf32>, vector<8x16xf32> -> vector<8x16xf32>
    %97 = tpu.concatenate %80, %96 in 0 : vector<8x16xf32>, vector<8x16xf32> -> vector<16x16xf32>
    %98 = tpu.concatenate %59, %97 in 1 : vector<16x16xf32>, vector<16x16xf32> -> vector<16x32xf32>
    %c0_26 = arith.constant 0 : index
    %c0_27 = arith.constant 0 : index
    %c0_28 = arith.constant 0 : index
    %99 = vector.load %arg3[%c0_26, %c0_27, %c0_28] : memref<2x32x32xf32, #tpu.memory_space<vmem>>, vector<1x32x32xf32>
    %100 = vector.shape_cast %99 : vector<1x32x32xf32> to vector<32x32xf32>
    %cst_29 = arith.constant dense<0.000000e+00> : vector<16x32xf32>
    %101 = tpu.matmul %98, %100, %cst_29 {dimension_numbers = #tpu.dot_dimension_numbers<[1], [0], [0], [1], [0, 0, 1, 1], [], []>} : vector<16x32xf32>, vector<32x32xf32>, vector<16x32xf32> -> vector<16x32xf32>
    %102 = vector.broadcast %11 : vector<1x32xf32> to vector<16x32xf32>
    %103 = arith.addf %101, %102 : vector<16x32xf32>
    %104 = arith.addf %0, %103 : vector<16x32xf32>
    %cst_30 = arith.constant dense<0.000000e+00> : vector<16xf32>
    %105 = vector.multi_reduction <add>, %104, %cst_30 [1] : vector<16x32xf32> to vector<16xf32>
    %106 = vector.shape_cast %105 : vector<16xf32> to vector<16x1xf32>
    %cst_31 = arith.constant 3.200000e+01 : f32
    %107 = vector.broadcast %cst_31 : f32 to vector<16x1xf32>
    %108 = arith.divf %106, %107 : vector<16x1xf32>
    %109 = vector.broadcast %108 : vector<16x1xf32> to vector<16x32xf32>
    %110 = arith.subf %104, %109 : vector<16x32xf32>
    %111 = arith.mulf %110, %110 : vector<16x32xf32>
    %cst_32 = arith.constant dense<0.000000e+00> : vector<16xf32>
    %112 = vector.multi_reduction <add>, %111, %cst_32 [1] : vector<16x32xf32> to vector<16xf32>
    %113 = vector.shape_cast %112 : vector<16xf32> to vector<16x1xf32>
    %cst_33 = arith.constant 3.200000e+01 : f32
    %114 = vector.broadcast %cst_33 : f32 to vector<16x1xf32>
    %115 = arith.divf %113, %114 : vector<16x1xf32>
    %116 = vector.broadcast %108 : vector<16x1xf32> to vector<16x32xf32>
    %117 = arith.subf %104, %116 : vector<16x32xf32>
    %cst_34 = arith.constant 9.99999974E-6 : f32
    %118 = vector.broadcast %cst_34 : f32 to vector<16x1xf32>
    %119 = arith.addf %115, %118 : vector<16x1xf32>
    %120 = math.rsqrt %119 : vector<16x1xf32>
    %121 = vector.broadcast %120 : vector<16x1xf32> to vector<16x32xf32>
    %122 = arith.mulf %117, %121 : vector<16x32xf32>
    %123 = vector.broadcast %13 : vector<1x32xf32> to vector<16x32xf32>
    %124 = arith.mulf %122, %123 : vector<16x32xf32>
    %125 = vector.broadcast %14 : vector<1x32xf32> to vector<16x32xf32>
    %126 = arith.addf %124, %125 : vector<16x32xf32>
    %c0_35 = arith.constant 0 : index
    %c0_36 = arith.constant 0 : index
    %c0_37 = arith.constant 0 : index
    %127 = vector.load %arg4[%c0_35, %c0_36, %c0_37] : memref<2x32x64xf32, #tpu.memory_space<vmem>>, vector<1x32x64xf32>
    %128 = vector.shape_cast %127 : vector<1x32x64xf32> to vector<32x64xf32>
    %cst_38 = arith.constant dense<0.000000e+00> : vector<16x64xf32>
    %129 = tpu.matmul %126, %128, %cst_38 {dimension_numbers = #tpu.dot_dimension_numbers<[1], [0], [0], [1], [0, 0, 1, 1], [], []>} : vector<16x32xf32>, vector<32x64xf32>, vector<16x64xf32> -> vector<16x64xf32>
    %130 = vector.broadcast %10 : vector<1x64xf32> to vector<16x64xf32>
    %131 = arith.addf %129, %130 : vector<16x64xf32>
    %cst_39 = arith.constant 0.000000e+00 : f32
    %132 = vector.broadcast %cst_39 : f32 to vector<16x64xf32>
    %133 = arith.maximumf %131, %132 : vector<16x64xf32>
    %c0_40 = arith.constant 0 : index
    %c0_41 = arith.constant 0 : index
    %c0_42 = arith.constant 0 : index
    %134 = vector.load %arg5[%c0_40, %c0_41, %c0_42] : memref<2x64x32xf32, #tpu.memory_space<vmem>>, vector<1x64x32xf32>
    %135 = vector.shape_cast %134 : vector<1x64x32xf32> to vector<64x32xf32>
    %cst_43 = arith.constant dense<0.000000e+00> : vector<16x32xf32>
    %136 = tpu.matmul %133, %135, %cst_43 {dimension_numbers = #tpu.dot_dimension_numbers<[1], [0], [0], [1], [0, 0, 1, 1], [], []>} : vector<16x64xf32>, vector<64x32xf32>, vector<16x32xf32> -> vector<16x32xf32>
    %137 = vector.broadcast %12 : vector<1x32xf32> to vector<16x32xf32>
    %138 = arith.addf %136, %137 : vector<16x32xf32>
    %139 = arith.addf %126, %138 : vector<16x32xf32>
    %cst_44 = arith.constant dense<0.000000e+00> : vector<16xf32>
    %140 = vector.multi_reduction <add>, %139, %cst_44 [1] : vector<16x32xf32> to vector<16xf32>
    %141 = vector.shape_cast %140 : vector<16xf32> to vector<16x1xf32>
    %cst_45 = arith.constant 3.200000e+01 : f32
    %142 = vector.broadcast %cst_45 : f32 to vector<16x1xf32>
    %143 = arith.divf %141, %142 : vector<16x1xf32>
    %144 = vector.broadcast %143 : vector<16x1xf32> to vector<16x32xf32>
    %145 = arith.subf %139, %144 : vector<16x32xf32>
    %146 = arith.mulf %145, %145 : vector<16x32xf32>
    %cst_46 = arith.constant dense<0.000000e+00> : vector<16xf32>
    %147 = vector.multi_reduction <add>, %146, %cst_46 [1] : vector<16x32xf32> to vector<16xf32>
    %148 = vector.shape_cast %147 : vector<16xf32> to vector<16x1xf32>
    %cst_47 = arith.constant 3.200000e+01 : f32
    %149 = vector.broadcast %cst_47 : f32 to vector<16x1xf32>
    %150 = arith.divf %148, %149 : vector<16x1xf32>
    %151 = vector.broadcast %143 : vector<16x1xf32> to vector<16x32xf32>
    %152 = arith.subf %139, %151 : vector<16x32xf32>
    %cst_48 = arith.constant 9.99999974E-6 : f32
    %153 = vector.broadcast %cst_48 : f32 to vector<16x1xf32>
    %154 = arith.addf %150, %153 : vector<16x1xf32>
    %155 = math.rsqrt %154 : vector<16x1xf32>
    %156 = vector.broadcast %155 : vector<16x1xf32> to vector<16x32xf32>
    %157 = arith.mulf %152, %156 : vector<16x32xf32>
    %158 = vector.broadcast %15 : vector<1x32xf32> to vector<16x32xf32>
    %159 = arith.mulf %157, %158 : vector<16x32xf32>
    %160 = vector.broadcast %16 : vector<1x32xf32> to vector<16x32xf32>
    %161 = arith.addf %159, %160 : vector<16x32xf32>
    %162 = vector.extract_strided_slice %1 {offsets = [8, 0], sizes = [1, 96], strides = [1, 1]} : vector<16x96xf32> to vector<1x96xf32>
    %163 = vector.extract_strided_slice %1 {offsets = [9, 0], sizes = [1, 64], strides = [1, 1]} : vector<16x96xf32> to vector<1x64xf32>
    %164 = vector.extract_strided_slice %1 {offsets = [10, 0], sizes = [1, 32], strides = [1, 1]} : vector<16x96xf32> to vector<1x32xf32>
    %165 = vector.extract_strided_slice %1 {offsets = [11, 0], sizes = [1, 32], strides = [1, 1]} : vector<16x96xf32> to vector<1x32xf32>
    %166 = vector.extract_strided_slice %1 {offsets = [12, 0], sizes = [1, 32], strides = [1, 1]} : vector<16x96xf32> to vector<1x32xf32>
    %167 = vector.extract_strided_slice %1 {offsets = [13, 0], sizes = [1, 32], strides = [1, 1]} : vector<16x96xf32> to vector<1x32xf32>
    %168 = vector.extract_strided_slice %1 {offsets = [14, 0], sizes = [1, 32], strides = [1, 1]} : vector<16x96xf32> to vector<1x32xf32>
    %169 = vector.extract_strided_slice %1 {offsets = [15, 0], sizes = [1, 32], strides = [1, 1]} : vector<16x96xf32> to vector<1x32xf32>
    %c1 = arith.constant 1 : index
    %c0_49 = arith.constant 0 : index
    %c0_50 = arith.constant 0 : index
    %170 = vector.load %arg2[%c1, %c0_49, %c0_50] : memref<2x32x96xf32, #tpu.memory_space<vmem>>, vector<1x32x96xf32>
    %171 = vector.shape_cast %170 : vector<1x32x96xf32> to vector<32x96xf32>
    %cst_51 = arith.constant dense<0.000000e+00> : vector<16x96xf32>
    %172 = tpu.matmul %161, %171, %cst_51 {dimension_numbers = #tpu.dot_dimension_numbers<[1], [0], [0], [1], [0, 0, 1, 1], [], []>} : vector<16x32xf32>, vector<32x96xf32>, vector<16x96xf32> -> vector<16x96xf32>
    %173 = vector.broadcast %162 : vector<1x96xf32> to vector<16x96xf32>
    %174 = arith.addf %172, %173 : vector<16x96xf32>
    %175 = vector.extract_strided_slice %174 {offsets = [0, 0], sizes = [16, 16], strides = [1, 1]} : vector<16x96xf32> to vector<16x16xf32>
    %cst_52 = arith.constant 2.500000e-01 : f32
    %176 = vector.broadcast %cst_52 : f32 to vector<16x16xf32>
    %177 = arith.mulf %175, %176 : vector<16x16xf32>
    %178 = vector.extract_strided_slice %174 {offsets = [0, 32], sizes = [16, 16], strides = [1, 1]} : vector<16x96xf32> to vector<16x16xf32>
    %179 = vector.extract_strided_slice %174 {offsets = [0, 64], sizes = [16, 16], strides = [1, 1]} : vector<16x96xf32> to vector<16x16xf32>
    %180 = vector.extract_strided_slice %177 {offsets = [0, 0], sizes = [8, 16], strides = [1, 1]} : vector<16x16xf32> to vector<8x16xf32>
    %181 = vector.extract_strided_slice %178 {offsets = [0, 0], sizes = [8, 16], strides = [1, 1]} : vector<16x16xf32> to vector<8x16xf32>
    %182 = vector.extract_strided_slice %179 {offsets = [0, 0], sizes = [8, 16], strides = [1, 1]} : vector<16x16xf32> to vector<8x16xf32>
    %cst_53 = arith.constant dense<0.000000e+00> : vector<8x8xf32>
    %183 = tpu.matmul %180, %181, %cst_53 {dimension_numbers = #tpu.dot_dimension_numbers<[1], [1], [0], [0], [0, 0, 1, 0], [], []>} : vector<8x16xf32>, vector<8x16xf32>, vector<8x8xf32> -> vector<8x8xf32>
    %184 = arith.addf %183, %5 : vector<8x8xf32>
    %cst_54 = arith.constant dense<0xFF800000> : vector<8xf32>
    %185 = vector.multi_reduction <maximumf>, %184, %cst_54 [1] : vector<8x8xf32> to vector<8xf32>
    %186 = vector.shape_cast %185 : vector<8xf32> to vector<8x1xf32>
    %187 = vector.broadcast %186 : vector<8x1xf32> to vector<8x8xf32>
    %188 = arith.subf %184, %187 : vector<8x8xf32>
    %189 = math.exp %188 : vector<8x8xf32>
    %cst_55 = arith.constant dense<0.000000e+00> : vector<8xf32>
    %190 = vector.multi_reduction <add>, %189, %cst_55 [1] : vector<8x8xf32> to vector<8xf32>
    %191 = vector.shape_cast %190 : vector<8xf32> to vector<8x1xf32>
    %192 = tpu.reciprocal %191 : vector<8x1xf32> -> vector<8x1xf32>
    %193 = vector.broadcast %192 : vector<8x1xf32> to vector<8x8xf32>
    %194 = arith.mulf %189, %193 : vector<8x8xf32>
    %cst_56 = arith.constant dense<0.000000e+00> : vector<8x16xf32>
    %195 = tpu.matmul %194, %182, %cst_56 {dimension_numbers = #tpu.dot_dimension_numbers<[1], [0], [0], [1], [0, 0, 1, 1], [], []>} : vector<8x8xf32>, vector<8x16xf32>, vector<8x16xf32> -> vector<8x16xf32>
    %196 = vector.extract_strided_slice %177 {offsets = [8, 0], sizes = [8, 16], strides = [1, 1]} : vector<16x16xf32> to vector<8x16xf32>
    %197 = vector.extract_strided_slice %178 {offsets = [8, 0], sizes = [8, 16], strides = [1, 1]} : vector<16x16xf32> to vector<8x16xf32>
    %198 = vector.extract_strided_slice %179 {offsets = [8, 0], sizes = [8, 16], strides = [1, 1]} : vector<16x16xf32> to vector<8x16xf32>
    %cst_57 = arith.constant dense<0.000000e+00> : vector<8x8xf32>
    %199 = tpu.matmul %196, %197, %cst_57 {dimension_numbers = #tpu.dot_dimension_numbers<[1], [1], [0], [0], [0, 0, 1, 0], [], []>} : vector<8x16xf32>, vector<8x16xf32>, vector<8x8xf32> -> vector<8x8xf32>
    %200 = arith.addf %199, %8 : vector<8x8xf32>
    %cst_58 = arith.constant dense<0xFF800000> : vector<8xf32>
    %201 = vector.multi_reduction <maximumf>, %200, %cst_58 [1] : vector<8x8xf32> to vector<8xf32>
    %202 = vector.shape_cast %201 : vector<8xf32> to vector<8x1xf32>
    %203 = vector.broadcast %202 : vector<8x1xf32> to vector<8x8xf32>
    %204 = arith.subf %200, %203 : vector<8x8xf32>
    %205 = math.exp %204 : vector<8x8xf32>
    %cst_59 = arith.constant dense<0.000000e+00> : vector<8xf32>
    %206 = vector.multi_reduction <add>, %205, %cst_59 [1] : vector<8x8xf32> to vector<8xf32>
    %207 = vector.shape_cast %206 : vector<8xf32> to vector<8x1xf32>
    %208 = tpu.reciprocal %207 : vector<8x1xf32> -> vector<8x1xf32>
    %209 = vector.broadcast %208 : vector<8x1xf32> to vector<8x8xf32>
    %210 = arith.mulf %205, %209 : vector<8x8xf32>
    %cst_60 = arith.constant dense<0.000000e+00> : vector<8x16xf32>
    %211 = tpu.matmul %210, %198, %cst_60 {dimension_numbers = #tpu.dot_dimension_numbers<[1], [0], [0], [1], [0, 0, 1, 1], [], []>} : vector<8x8xf32>, vector<8x16xf32>, vector<8x16xf32> -> vector<8x16xf32>
    %212 = tpu.concatenate %195, %211 in 0 : vector<8x16xf32>, vector<8x16xf32> -> vector<16x16xf32>
    %213 = vector.extract_strided_slice %174 {offsets = [0, 16], sizes = [16, 16], strides = [1, 1]} : vector<16x96xf32> to vector<16x16xf32>
    %cst_61 = arith.constant 2.500000e-01 : f32
    %214 = vector.broadcast %cst_61 : f32 to vector<16x16xf32>
    %215 = arith.mulf %213, %214 : vector<16x16xf32>
    %216 = vector.extract_strided_slice %174 {offsets = [0, 48], sizes = [16, 16], strides = [1, 1]} : vector<16x96xf32> to vector<16x16xf32>
    %217 = vector.extract_strided_slice %174 {offsets = [0, 80], sizes = [16, 16], strides = [1, 1]} : vector<16x96xf32> to vector<16x16xf32>
    %218 = vector.extract_strided_slice %215 {offsets = [0, 0], sizes = [8, 16], strides = [1, 1]} : vector<16x16xf32> to vector<8x16xf32>
    %219 = vector.extract_strided_slice %216 {offsets = [0, 0], sizes = [8, 16], strides = [1, 1]} : vector<16x16xf32> to vector<8x16xf32>
    %220 = vector.extract_strided_slice %217 {offsets = [0, 0], sizes = [8, 16], strides = [1, 1]} : vector<16x16xf32> to vector<8x16xf32>
    %cst_62 = arith.constant dense<0.000000e+00> : vector<8x8xf32>
    %221 = tpu.matmul %218, %219, %cst_62 {dimension_numbers = #tpu.dot_dimension_numbers<[1], [1], [0], [0], [0, 0, 1, 0], [], []>} : vector<8x16xf32>, vector<8x16xf32>, vector<8x8xf32> -> vector<8x8xf32>
    %222 = arith.addf %221, %5 : vector<8x8xf32>
    %cst_63 = arith.constant dense<0xFF800000> : vector<8xf32>
    %223 = vector.multi_reduction <maximumf>, %222, %cst_63 [1] : vector<8x8xf32> to vector<8xf32>
    %224 = vector.shape_cast %223 : vector<8xf32> to vector<8x1xf32>
    %225 = vector.broadcast %224 : vector<8x1xf32> to vector<8x8xf32>
    %226 = arith.subf %222, %225 : vector<8x8xf32>
    %227 = math.exp %226 : vector<8x8xf32>
    %cst_64 = arith.constant dense<0.000000e+00> : vector<8xf32>
    %228 = vector.multi_reduction <add>, %227, %cst_64 [1] : vector<8x8xf32> to vector<8xf32>
    %229 = vector.shape_cast %228 : vector<8xf32> to vector<8x1xf32>
    %230 = tpu.reciprocal %229 : vector<8x1xf32> -> vector<8x1xf32>
    %231 = vector.broadcast %230 : vector<8x1xf32> to vector<8x8xf32>
    %232 = arith.mulf %227, %231 : vector<8x8xf32>
    %cst_65 = arith.constant dense<0.000000e+00> : vector<8x16xf32>
    %233 = tpu.matmul %232, %220, %cst_65 {dimension_numbers = #tpu.dot_dimension_numbers<[1], [0], [0], [1], [0, 0, 1, 1], [], []>} : vector<8x8xf32>, vector<8x16xf32>, vector<8x16xf32> -> vector<8x16xf32>
    %234 = vector.extract_strided_slice %215 {offsets = [8, 0], sizes = [8, 16], strides = [1, 1]} : vector<16x16xf32> to vector<8x16xf32>
    %235 = vector.extract_strided_slice %216 {offsets = [8, 0], sizes = [8, 16], strides = [1, 1]} : vector<16x16xf32> to vector<8x16xf32>
    %236 = vector.extract_strided_slice %217 {offsets = [8, 0], sizes = [8, 16], strides = [1, 1]} : vector<16x16xf32> to vector<8x16xf32>
    %cst_66 = arith.constant dense<0.000000e+00> : vector<8x8xf32>
    %237 = tpu.matmul %234, %235, %cst_66 {dimension_numbers = #tpu.dot_dimension_numbers<[1], [1], [0], [0], [0, 0, 1, 0], [], []>} : vector<8x16xf32>, vector<8x16xf32>, vector<8x8xf32> -> vector<8x8xf32>
    %238 = arith.addf %237, %8 : vector<8x8xf32>
    %cst_67 = arith.constant dense<0xFF800000> : vector<8xf32>
    %239 = vector.multi_reduction <maximumf>, %238, %cst_67 [1] : vector<8x8xf32> to vector<8xf32>
    %240 = vector.shape_cast %239 : vector<8xf32> to vector<8x1xf32>
    %241 = vector.broadcast %240 : vector<8x1xf32> to vector<8x8xf32>
    %242 = arith.subf %238, %241 : vector<8x8xf32>
    %243 = math.exp %242 : vector<8x8xf32>
    %cst_68 = arith.constant dense<0.000000e+00> : vector<8xf32>
    %244 = vector.multi_reduction <add>, %243, %cst_68 [1] : vector<8x8xf32> to vector<8xf32>
    %245 = vector.shape_cast %244 : vector<8xf32> to vector<8x1xf32>
    %246 = tpu.reciprocal %245 : vector<8x1xf32> -> vector<8x1xf32>
    %247 = vector.broadcast %246 : vector<8x1xf32> to vector<8x8xf32>
    %248 = arith.mulf %243, %247 : vector<8x8xf32>
    %cst_69 = arith.constant dense<0.000000e+00> : vector<8x16xf32>
    %249 = tpu.matmul %248, %236, %cst_69 {dimension_numbers = #tpu.dot_dimension_numbers<[1], [0], [0], [1], [0, 0, 1, 1], [], []>} : vector<8x8xf32>, vector<8x16xf32>, vector<8x16xf32> -> vector<8x16xf32>
    %250 = tpu.concatenate %233, %249 in 0 : vector<8x16xf32>, vector<8x16xf32> -> vector<16x16xf32>
    %251 = tpu.concatenate %212, %250 in 1 : vector<16x16xf32>, vector<16x16xf32> -> vector<16x32xf32>
    %c1_70 = arith.constant 1 : index
    %c0_71 = arith.constant 0 : index
    %c0_72 = arith.constant 0 : index
    %252 = vector.load %arg3[%c1_70, %c0_71, %c0_72] : memref<2x32x32xf32, #tpu.memory_space<vmem>>, vector<1x32x32xf32>
    %253 = vector.shape_cast %252 : vector<1x32x32xf32> to vector<32x32xf32>
    %cst_73 = arith.constant dense<0.000000e+00> : vector<16x32xf32>
    %254 = tpu.matmul %251, %253, %cst_73 {dimension_numbers = #tpu.dot_dimension_numbers<[1], [0], [0], [1], [0, 0, 1, 1], [], []>} : vector<16x32xf32>, vector<32x32xf32>, vector<16x32xf32> -> vector<16x32xf32>
    %255 = vector.broadcast %164 : vector<1x32xf32> to vector<16x32xf32>
    %256 = arith.addf %254, %255 : vector<16x32xf32>
    %257 = arith.addf %161, %256 : vector<16x32xf32>
    %cst_74 = arith.constant dense<0.000000e+00> : vector<16xf32>
    %258 = vector.multi_reduction <add>, %257, %cst_74 [1] : vector<16x32xf32> to vector<16xf32>
    %259 = vector.shape_cast %258 : vector<16xf32> to vector<16x1xf32>
    %cst_75 = arith.constant 3.200000e+01 : f32
    %260 = vector.broadcast %cst_75 : f32 to vector<16x1xf32>
    %261 = arith.divf %259, %260 : vector<16x1xf32>
    %262 = vector.broadcast %261 : vector<16x1xf32> to vector<16x32xf32>
    %263 = arith.subf %257, %262 : vector<16x32xf32>
    %264 = arith.mulf %263, %263 : vector<16x32xf32>
    %cst_76 = arith.constant dense<0.000000e+00> : vector<16xf32>
    %265 = vector.multi_reduction <add>, %264, %cst_76 [1] : vector<16x32xf32> to vector<16xf32>
    %266 = vector.shape_cast %265 : vector<16xf32> to vector<16x1xf32>
    %cst_77 = arith.constant 3.200000e+01 : f32
    %267 = vector.broadcast %cst_77 : f32 to vector<16x1xf32>
    %268 = arith.divf %266, %267 : vector<16x1xf32>
    %269 = vector.broadcast %261 : vector<16x1xf32> to vector<16x32xf32>
    %270 = arith.subf %257, %269 : vector<16x32xf32>
    %cst_78 = arith.constant 9.99999974E-6 : f32
    %271 = vector.broadcast %cst_78 : f32 to vector<16x1xf32>
    %272 = arith.addf %268, %271 : vector<16x1xf32>
    %273 = math.rsqrt %272 : vector<16x1xf32>
    %274 = vector.broadcast %273 : vector<16x1xf32> to vector<16x32xf32>
    %275 = arith.mulf %270, %274 : vector<16x32xf32>
    %276 = vector.broadcast %166 : vector<1x32xf32> to vector<16x32xf32>
    %277 = arith.mulf %275, %276 : vector<16x32xf32>
    %278 = vector.broadcast %167 : vector<1x32xf32> to vector<16x32xf32>
    %279 = arith.addf %277, %278 : vector<16x32xf32>
    %c1_79 = arith.constant 1 : index
    %c0_80 = arith.constant 0 : index
    %c0_81 = arith.constant 0 : index
    %280 = vector.load %arg4[%c1_79, %c0_80, %c0_81] : memref<2x32x64xf32, #tpu.memory_space<vmem>>, vector<1x32x64xf32>
    %281 = vector.shape_cast %280 : vector<1x32x64xf32> to vector<32x64xf32>
    %cst_82 = arith.constant dense<0.000000e+00> : vector<16x64xf32>
    %282 = tpu.matmul %279, %281, %cst_82 {dimension_numbers = #tpu.dot_dimension_numbers<[1], [0], [0], [1], [0, 0, 1, 1], [], []>} : vector<16x32xf32>, vector<32x64xf32>, vector<16x64xf32> -> vector<16x64xf32>
    %283 = vector.broadcast %163 : vector<1x64xf32> to vector<16x64xf32>
    %284 = arith.addf %282, %283 : vector<16x64xf32>
    %cst_83 = arith.constant 0.000000e+00 : f32
    %285 = vector.broadcast %cst_83 : f32 to vector<16x64xf32>
    %286 = arith.maximumf %284, %285 : vector<16x64xf32>
    %c1_84 = arith.constant 1 : index
    %c0_85 = arith.constant 0 : index
    %c0_86 = arith.constant 0 : index
    %287 = vector.load %arg5[%c1_84, %c0_85, %c0_86] : memref<2x64x32xf32, #tpu.memory_space<vmem>>, vector<1x64x32xf32>
    %288 = vector.shape_cast %287 : vector<1x64x32xf32> to vector<64x32xf32>
    %cst_87 = arith.constant dense<0.000000e+00> : vector<16x32xf32>
    %289 = tpu.matmul %286, %288, %cst_87 {dimension_numbers = #tpu.dot_dimension_numbers<[1], [0], [0], [1], [0, 0, 1, 1], [], []>} : vector<16x64xf32>, vector<64x32xf32>, vector<16x32xf32> -> vector<16x32xf32>
    %290 = vector.broadcast %165 : vector<1x32xf32> to vector<16x32xf32>
    %291 = arith.addf %289, %290 : vector<16x32xf32>
    %292 = arith.addf %279, %291 : vector<16x32xf32>
    %cst_88 = arith.constant dense<0.000000e+00> : vector<16xf32>
    %293 = vector.multi_reduction <add>, %292, %cst_88 [1] : vector<16x32xf32> to vector<16xf32>
    %294 = vector.shape_cast %293 : vector<16xf32> to vector<16x1xf32>
    %cst_89 = arith.constant 3.200000e+01 : f32
    %295 = vector.broadcast %cst_89 : f32 to vector<16x1xf32>
    %296 = arith.divf %294, %295 : vector<16x1xf32>
    %297 = vector.broadcast %296 : vector<16x1xf32> to vector<16x32xf32>
    %298 = arith.subf %292, %297 : vector<16x32xf32>
    %299 = arith.mulf %298, %298 : vector<16x32xf32>
    %cst_90 = arith.constant dense<0.000000e+00> : vector<16xf32>
    %300 = vector.multi_reduction <add>, %299, %cst_90 [1] : vector<16x32xf32> to vector<16xf32>
    %301 = vector.shape_cast %300 : vector<16xf32> to vector<16x1xf32>
    %cst_91 = arith.constant 3.200000e+01 : f32
    %302 = vector.broadcast %cst_91 : f32 to vector<16x1xf32>
    %303 = arith.divf %301, %302 : vector<16x1xf32>
    %304 = vector.broadcast %296 : vector<16x1xf32> to vector<16x32xf32>
    %305 = arith.subf %292, %304 : vector<16x32xf32>
    %cst_92 = arith.constant 9.99999974E-6 : f32
    %306 = vector.broadcast %cst_92 : f32 to vector<16x1xf32>
    %307 = arith.addf %303, %306 : vector<16x1xf32>
    %308 = math.rsqrt %307 : vector<16x1xf32>
    %309 = vector.broadcast %308 : vector<16x1xf32> to vector<16x32xf32>
    %310 = arith.mulf %305, %309 : vector<16x32xf32>
    %311 = vector.broadcast %168 : vector<1x32xf32> to vector<16x32xf32>
    %312 = arith.mulf %310, %311 : vector<16x32xf32>
    %313 = vector.broadcast %169 : vector<1x32xf32> to vector<16x32xf32>
    %314 = arith.addf %312, %313 : vector<16x32xf32>
    %c0_93 = arith.constant 0 : index
    %c0_94 = arith.constant 0 : index
    %315 = vector.load %arg7[%c0_93, %c0_94] : memref<16x32xf32, #tpu.memory_space<vmem>>, vector<16x32xf32>
    tpu.vector_store %arg7[%c0_93, %c0_94], %314 {strides = array<i32>} : memref<16x32xf32, #tpu.memory_space<vmem>>, vector<16x32xf32>,
    return
  }
}

</mosaic_0001>

<llo_original>
// kernel: tpu_custom_call.1
$region0: #{tpu_custom_call.1}
  #allocation0 [shape = 'u32[]', space=smem, size = 0x4, offset = 0x4, fixed_abs, tag = 'smem constant byte address 0x4 - core index']
  #allocation1 [shape = 'u32[144,128]{1,0:T(1,128)}', space=vmem, size = 0x12000, scoped, tag = 'internal scratch']
  %s0 = inlined_call_operand.hbm [shape: f32[16,32], index: 0, kind: input, shape index: {}]
  %s1 = inlined_call_operand.vmem [shape: f32[2,8], index: 1, kind: input, shape index: {}]
  %s2 = inlined_call_operand.vmem [shape: f32[2,32,96], index: 2, kind: input, shape index: {}]
  %s3 = inlined_call_operand.vmem [shape: f32[2,32,32], index: 3, kind: input, shape index: {}]
  %s4 = inlined_call_operand.vmem [shape: f32[2,32,64], index: 4, kind: input, shape index: {}]
  %s5 = inlined_call_operand.vmem [shape: f32[2,64,32], index: 5, kind: input, shape index: {}]
  %s6 = inlined_call_operand.vmem [shape: f32[16,96], index: 6, kind: input, shape index: {}]
  %s7 = inlined_call_operand.hbm [shape: f32[16,32], index: 7, kind: output, shape index: {}]
  %s8 = sld [smem:[#allocation0]]
  $region42: #{tpu_custom_call.1} parent=0
    _
  %s10 = ssub.s32 1, %s8
  %s11 = scalar_select 0, %s10, %s8
  $region1: #{tpu_custom_call.1} parent=0
    #allocation2 [shape = 'u8[8192]{0}', space=vmem, size = 0x2000, scoped, tag = 'input window, operand 0, single buffered']
    #allocation3 [shape = 's32[1]{0}', space=sflag, size = 0x4, scoped, tag = 'scoped memory for tpu_custom_call.1']
    #allocation4 [shape = 's32[1]{0}', space=sflag, size = 0x4, scoped, tag = 'scoped memory for tpu_custom_call.1']
    #allocation5 [shape = 'u8[8192]{0}', space=vmem, size = 0x2000, scoped, tag = 'output window, operand 0, single buffered']
    %12 = vsyncpa [#allocation3], 0
    %13 = vsyncpa [#allocation4], 0
    // Predicated region
    $region2: #{tpu_custom_call.1} parent=1 // pred_check
      _
    $region3: #{tpu_custom_call.1} parent=1 // pred_check_branch
      %15 = sbr.rel (0) target = $region5
    $region4: #{tpu_custom_call.1} parent=1 // pred_region
      %s17 = ssub.s32 256, 256
      %18 = vsyncadd [#allocation3], %s17
      %s19 = sshll.u32 [#allocation2], 4
      %s20 = int_to_ptr.vmem [resolvable:$true] %s19
      %25 = dma.hbm_to_vmem [thread:$0]  %s0, 256, %s20, [#allocation3], 128, 128, 8
    $region5: #{tpu_custom_call.1} parent=1 // pred_fallthru
      _
    // Predicated region
    $region6: #{tpu_custom_call.1} parent=1 // pred_check
      _
    $region7: #{tpu_custom_call.1} parent=1 // pred_check_branch
      %27 = sbr.rel (0) target = $region9
    $region8: #{tpu_custom_call.1} parent=1 // pred_region
      _
    $region9: #{tpu_custom_call.1} parent=1 // pred_fallthru
      _
    // Predicated region
    $region10: #{tpu_custom_call.1} parent=1 // pred_check
      _
    $region11: #{tpu_custom_call.1} parent=1 // pred_check_branch
      %29 = sbr.rel (0) target = $region13
    $region12: #{tpu_custom_call.1} parent=1 // pred_region
      _
    $region13: #{tpu_custom_call.1} parent=1 // pred_fallthru
      _
    // Predicated region
    $region14: #{tpu_custom_call.1} parent=1 // pred_check
      _
    $region15: #{tpu_custom_call.1} parent=1 // pred_check_branch
      %31 = sbr.rel (0) target = $region17
    $region16: #{tpu_custom_call.1} parent=1 // pred_region
      _
    $region17: #{tpu_custom_call.1} parent=1 // pred_fallthru
      _
    // Predicated region
    $region18: #{tpu_custom_call.1} parent=1 // pred_check
      _
    $region19: #{tpu_custom_call.1} parent=1 // pred_check_branch
      %33 = sbr.rel (0) target = $region21
    $region20: #{tpu_custom_call.1} parent=1 // pred_region
      _
    $region21: #{tpu_custom_call.1} parent=1 // pred_fallthru
      _
    // Predicated region
    $region22: #{tpu_custom_call.1} parent=1 // pred_check
      _
    $region23: #{tpu_custom_call.1} parent=1 // pred_check_branch
      %35 = sbr.rel (0) target = $region25
    $region24: #{tpu_custom_call.1} parent=1 // pred_region
      _
    $region25: #{tpu_custom_call.1} parent=1 // pred_fallthru
      _
    // Predicated region
    $region26: #{tpu_custom_call.1} parent=1 // pred_check
      _
    $region27: #{tpu_custom_call.1} parent=1 // pred_check_branch
      %37 = sbr.rel (0) target = $region29
    $region28: #{tpu_custom_call.1} parent=1 // pred_region
      _
    $region29: #{tpu_custom_call.1} parent=1 // pred_fallthru
      _
    // Predicated region
    $region30: #{tpu_custom_call.1} parent=1 // pred_check
      _
    $region31: #{tpu_custom_call.1} parent=1 // pred_check_branch
      %39 = sbr.rel (0) target = $region33
    $region32: #{tpu_custom_call.1} parent=1 // pred_region
      %40 = dma.done [#allocation3], 256
    $region33: #{tpu_custom_call.1} parent=1 // pred_fallthru
      _
    %v41 = vld [vmem:[#allocation2] sm:$0xff]
    %v42 = vld [vmem:[#allocation2 + $0x8] sm:$0xff]
    %v43 = vld [vmem:[%s6] sm:$0xff]
    %v44 = vld [vmem:[%s6 + $0x8] sm:$0xff]
    %v45 = vld [vmem:[%s1] sm:$0x3]
    %v46 = vlaneseq
    %v47 = vshrl.u32 %v46, 7
    %v48 = vsub.s32 0, %v47
    %v49 = vrot.slane %v45, %v48
    %v50 = vlaneseq
    %v51 = vshrl.u32 %v50, 7
    %v52 = vsub.s32 1, %v51
    %v53 = vrot.slane %v45, %v52
    %v54 = vld [vmem:[%s2] sm:$0xff]
    %v55 = vld [vmem:[%s2 + $0x8] sm:$0xff]
    %v56 = vld [vmem:[%s2 + $0x10] sm:$0xff]
    %v57 = vld [vmem:[%s2 + $0x18] sm:$0xff]
    %v58 = vlaneseq
    %v59 = vshrl.u32 %v58, 7
    %v60 = vsub.s32 0, %v59
    %v61 = vrot.slane %v43, %v60
    %vm62 = vcmask 261120
    %v64 = vsel %vm62, %v41, 0
    %v67 = vsel %vm62, %v42, 0
    %69 = vmatprep.subr.mxu0 0.0
    %70 = vmatpush1.msra.mxu0 %v54
    %71 = vmatprep.subr.mxu0 0.0
    %72 = vmatpush1.msra.mxu0 %v55
    %73 = vmatprep.subr.mxu0 0.0
    %74 = vmatpush1.msra.mxu0 %v56
    %75 = vmatprep.subr.mxu0 0.0
    %76 = vmatpush1.msra.mxu0 %v57
    %77 = vmatprep.subr.mxu0 0.0
    %78 = vmatpush1.msra.mxu0 0.0
    %79 = vmatprep.subr.mxu0 0.0
    %80 = vmatpush1.msra.mxu0 0.0
    %81 = vmatprep.subr.mxu0 0.0
    %82 = vmatpush1.msra.mxu0 0.0
    %83 = vmatprep.subr.mxu0 0.0
    %84 = vmatpush1.msra.mxu0 0.0
    %85 = vmatprep.subr.mxu0 0.0
    %86 = vmatpush1.msra.mxu0 0.0
    %87 = vmatprep.subr.mxu0 0.0
    %88 = vmatpush1.msra.mxu0 0.0
    %89 = vmatprep.subr.mxu0 0.0
    %90 = vmatpush1.msra.mxu0 0.0
    %91 = vmatprep.subr.mxu0 0.0
    %92 = vmatpush1.msra.mxu0 0.0
    %93 = vmatprep.subr.mxu0 0.0
    %94 = vmatpush1.msra.mxu0 0.0
    %95 = vmatprep.subr.mxu0 0.0
    %96 = vmatpush1.msra.mxu0 0.0
    %97 = vmatprep.subr.mxu0 0.0
    %98 = vmatpush1.msra.mxu0 0.0
    %99 = vmatprep.subr.mxu0 0.0
    %100 = vmatpush1.msra.mxu0 0.0
    %101 = vmatprep.subr.mxu0 0.0
    %102 = vmatpush1.msra.mxu0 0.0
    %103 = vmatprep.subr.mxu0 0.0
    %104 = vmatpush1.msra.mxu0 0.0
    %105 = vmatprep.subr.mxu0 0.0
    %106 = vmatpush1.msra.mxu0 0.0
    %107 = vmatprep.subr.mxu0 0.0
    %108 = vmatpush1.msra.mxu0 0.0
    %109 = vmatprep.subr.mxu0 0.0
    %110 = vmatpush1.msra.mxu0 0.0
    %111 = vmatprep.subr.mxu0 0.0
    %112 = vmatpush1.msra.mxu0 0.0
    %113 = vmatprep.subr.mxu0 0.0
    %114 = vmatpush1.msra.mxu0 0.0
    %115 = vmatprep.subr.mxu0 0.0
    %116 = vmatpush1.msra.mxu0 0.0
    %117 = vmatprep.subr.mxu0 0.0
    %118 = vmatpush1.msra.mxu0 0.0
    %119 = vmatprep.subr.mxu0 0.0
    %120 = vmatpush1.msra.mxu0 0.0
    %121 = vmatprep.subr.mxu0 0.0
    %122 = vmatpush1.msra.mxu0 0.0
    %123 = vmatprep.subr.mxu0 0.0
    %124 = vmatpush1.msra.mxu0 0.0
    %125 = vmatprep.subr.mxu0 0.0
    %126 = vmatpush1.msra.mxu0 0.0
    %127 = vmatprep.subr.mxu0 0.0
    %128 = vmatpush1.msra.mxu0 0.0
    %129 = vmatprep.subr.mxu0 0.0
    %130 = vmatpush1.msra.mxu0 0.0
    %131 = vmatprep.subr.mxu0 0.0
    %132 = vmatpush1.msra.mxu0 0.0
    %133 = vmatprep.mubr.f32.mxu0 0.0
    %134 = vmatmul.mubr.f32.gmra.mrb[0].mxu0 %v64
    %v135 = vpop.f32.mrb[0].mxu0
    %v136 = vadd.f32 %v61, %v135
    %v137 = vpop.f32.mrb[0].mxu0
    %138 = vmatprep.mubr.f32.mxu0 0.0
    %139 = vmatmul.mubr.f32.gmra.mrb[0].mxu0 %v67
    %v140 = vpop.f32.mrb[0].mxu0
    %v141 = vadd.f32 %v61, %v140
    %v142 = vpop.f32.mrb[0].mxu0
    %143 = vdwg.mxu0
    %v144 = vmul.f32 %v136, 0.25
    %v145 = vmul.f32 %v141, 0.25
    %147 = vrot.lane.b32.xlu0 %v136, 96
    %v148 = vpop.permute.xlu0 %147
    %vm149 = vcmask 130048
    %v151 = vsel %vm149, %v144, 0
    %v153 = vsel %vm149, %v148, 0
    %155 = vmatprep.subr.mxu0 0.0
    %156 = vmatpush1.xpose.msra.mxu0 %v153
    %157 = vmatprep.subr.mxu0 0.0
    %158 = vmatpush1.xpose.msra.mxu0 0.0
    %159 = vmatprep.subr.mxu0 0.0
    %160 = vmatpush1.xpose.msra.mxu0 0.0
    %161 = vmatprep.subr.mxu0 0.0
    %162 = vmatpush1.xpose.msra.mxu0 0.0
    %163 = vmatprep.subr.mxu0 0.0
    %164 = vmatpush1.xpose.msra.mxu0 0.0
    %165 = vmatprep.subr.mxu0 0.0
    %166 = vmatpush1.xpose.msra.mxu0 0.0
    %167 = vmatprep.subr.mxu0 0.0
    %168 = vmatpush1.xpose.msra.mxu0 0.0
    %169 = vmatprep.subr.mxu0 0.0
    %170 = vmatpush1.xpose.msra.mxu0 0.0
    %171 = vmatprep.subr.mxu0 0.0
    %172 = vmatpush1.xpose.msra.mxu0 0.0
    %173 = vmatprep.subr.mxu0 0.0
    %174 = vmatpush1.xpose.msra.mxu0 0.0
    %175 = vmatprep.subr.mxu0 0.0
    %176 = vmatpush1.xpose.msra.mxu0 0.0
    %177 = vmatprep.subr.mxu0 0.0
    %178 = vmatpush1.xpose.msra.mxu0 0.0
    %179 = vmatprep.subr.mxu0 0.0
    %180 = vmatpush1.xpose.msra.mxu0 0.0
    %181 = vmatprep.subr.mxu0 0.0
    %182 = vmatpush1.xpose.msra.mxu0 0.0
    %183 = vmatprep.subr.mxu0 0.0
    %184 = vmatpush1.xpose.msra.mxu0 0.0
    %185 = vmatprep.subr.mxu0 0.0
    %186 = vmatpush1.xpose.msra.mxu0 0.0
    %187 = vmatprep.subr.mxu0 0.0
    %188 = vmatpush1.xpose.msra.mxu0 0.0
    %189 = vmatprep.subr.mxu0 0.0
    %190 = vmatpush1.xpose.msra.mxu0 0.0
    %191 = vmatprep.subr.mxu0 0.0
    %192 = vmatpush1.xpose.msra.mxu0 0.0
    %193 = vmatprep.subr.mxu0 0.0
    %194 = vmatpush1.xpose.msra.mxu0 0.0
    %195 = vmatprep.subr.mxu0 0.0
    %196 = vmatpush1.xpose.msra.mxu0 0.0
    %197 = vmatprep.subr.mxu0 0.0
    %198 = vmatpush1.xpose.msra.mxu0 0.0
    %199 = vmatprep.subr.mxu0 0.0
    %200 = vmatpush1.xpose.msra.mxu0 0.0
    %201 = vmatprep.subr.mxu0 0.0
    %202 = vmatpush1.xpose.msra.mxu0 0.0
    %203 = vmatprep.subr.mxu0 0.0
    %204 = vmatpush1.xpose.msra.mxu0 0.0
    %205 = vmatprep.subr.mxu0 0.0
    %206 = vmatpush1.xpose.msra.mxu0 0.0
    %207 = vmatprep.subr.mxu0 0.0
    %208 = vmatpush1.xpose.msra.mxu0 0.0
    %209 = vmatprep.subr.mxu0 0.0
    %210 = vmatpush1.xpose.msra.mxu0 0.0
    %211 = vmatprep.subr.mxu0 0.0
    %212 = vmatpush1.xpose.msra.mxu0 0.0
    %213 = vmatprep.subr.mxu0 0.0
    %214 = vmatpush1.xpose.msra.mxu0 0.0
    %215 = vmatprep.subr.mxu0 0.0
    %216 = vmatpush1.xpose.msra.mxu0 0.0
    %217 = vmatprep.subr.mxu0 0.0
    %218 = vmatpush1.xpose.msra.mxu0 0.0
    %219 = vmatprep.mubr.f32.mxu0 0.0
    %220 = vmatmul.mubr.f32.gmra.mrb[0].mxu0 %v151
    %v221 = vpop.f32.mrb[0].mxu0
    %v222 = vadd.f32 %v49, %v221
    %v223 = vpop.f32.mrb[0].mxu0
    %224 = vdwg.mxu0
    %vm225 = vcmask 64512
    %v226 = vsel %vm225, %v222, -inf
    %227 = vmax.xlane.f32.xlu0 %v226
    %v228 = vpop.xlane.xlu0 %227
    %v229 = vsub.f32 %v222, %v228
    %v230 = vmul.f32 %v229, 1.442695
    %v231 = vpow.pop %v230
    %v232 = vsel %vm225, %v231, 0.0
    %233 = vadd.xlane.f32.xlu0 %v232
    %v234 = vpop.xlane.xlu0 %233
    %v235 = vrcp.pop %v234
    %v236 = vmul.f32 %v231, %v235
    %237 = vrot.lane.b32.xlu0 %v136, 64
    %v238 = vpop.permute.xlu0 %237
    %v241 = vsel %vm225, %v236, 0
    %243 = vmatprep.subr.mxu0 0.0
    %244 = vmatpush1.msra.mxu0 %v238
    %245 = vmatprep.subr.mxu0 0.0
    %246 = vmatpush1.msra.mxu0 0.0
    %247 = vmatprep.subr.mxu0 0.0
    %248 = vmatpush1.msra.mxu0 0.0
    %249 = vmatprep.subr.mxu0 0.0
    %250 = vmatpush1.msra.mxu0 0.0
    %251 = vmatprep.subr.mxu0 0.0
    %252 = vmatpush1.msra.mxu0 0.0
    %253 = vmatprep.subr.mxu0 0.0
    %254 = vmatpush1.msra.mxu0 0.0
    %255 = vmatprep.subr.mxu0 0.0
    %256 = vmatpush1.msra.mxu0 0.0
    %257 = vmatprep.subr.mxu0 0.0
    %258 = vmatpush1.msra.mxu0 0.0
    %259 = vmatprep.subr.mxu0 0.0
    %260 = vmatpush1.msra.mxu0 0.0
    %261 = vmatprep.subr.mxu0 0.0
    %262 = vmatpush1.msra.mxu0 0.0
    %263 = vmatprep.subr.mxu0 0.0
    %264 = vmatpush1.msra.mxu0 0.0
    %265 = vmatprep.subr.mxu0 0.0
    %266 = vmatpush1.msra.mxu0 0.0
    %267 = vmatprep.subr.mxu0 0.0
    %268 = vmatpush1.msra.mxu0 0.0
    %269 = vmatprep.subr.mxu0 0.0
    %270 = vmatpush1.msra.mxu0 0.0
    %271 = vmatprep.subr.mxu0 0.0
    %272 = vmatpush1.msra.mxu0 0.0
    %273 = vmatprep.subr.mxu0 0.0
    %274 = vmatpush1.msra.mxu0 0.0
    %275 = vmatprep.subr.mxu0 0.0
    %276 = vmatpush1.msra.mxu0 0.0
    %277 = vmatprep.subr.mxu0 0.0
    %278 = vmatpush1.msra.mxu0 0.0
    %279 = vmatprep.subr.mxu0 0.0
    %280 = vmatpush1.msra.mxu0 0.0
    %281 = vmatprep.subr.mxu0 0.0
    %282 = vmatpush1.msra.mxu0 0.0
    %283 = vmatprep.subr.mxu0 0.0
    %284 = vmatpush1.msra.mxu0 0.0
    %285 = vmatprep.subr.mxu0 0.0
    %286 = vmatpush1.msra.mxu0 0.0
    %287 = vmatprep.subr.mxu0 0.0
    %288 = vmatpush1.msra.mxu0 0.0
    %289 = vmatprep.subr.mxu0 0.0
    %290 = vmatpush1.msra.mxu0 0.0
    %291 = vmatprep.subr.mxu0 0.0
    %292 = vmatpush1.msra.mxu0 0.0
    %293 = vmatprep.subr.mxu0 0.0
    %294 = vmatpush1.msra.mxu0 0.0
    %295 = vmatprep.subr.mxu0 0.0
    %296 = vmatpush1.msra.mxu0 0.0
    %297 = vmatprep.subr.mxu0 0.0
    %298 = vmatpush1.msra.mxu0 0.0
    %299 = vmatprep.subr.mxu0 0.0
    %300 = vmatpush1.msra.mxu0 0.0
    %301 = vmatprep.subr.mxu0 0.0
    %302 = vmatpush1.msra.mxu0 0.0
    %303 = vmatprep.subr.mxu0 0.0
    %304 = vmatpush1.msra.mxu0 0.0
    %305 = vmatprep.subr.mxu0 0.0
    %306 = vmatpush1.msra.mxu0 0.0
    %307 = vmatprep.mubr.f32.mxu0 0.0
    %308 = vmatmul.mubr.f32.gmra.mrb[0].mxu0 %v241
    %v309 = vpop.f32.mrb[0].mxu0
    %v310 = vadd.f32 0.0, %v309
    %v311 = vpop.f32.mrb[0].mxu0
    %312 = vdwg.mxu0
    %314 = vrot.lane.b32.xlu0 %v141, 96
    %v315 = vpop.permute.xlu0 %314
    %v317 = vsel %vm149, %v145, 0
    %v319 = vsel %vm149, %v315, 0
    %321 = vmatprep.subr.mxu0 0.0
    %322 = vmatpush1.xpose.msra.mxu0 %v319
    %323 = vmatprep.subr.mxu0 0.0
    %324 = vmatpush1.xpose.msra.mxu0 0.0
    %325 = vmatprep.subr.mxu0 0.0
    %326 = vmatpush1.xpose.msra.mxu0 0.0
    %327 = vmatprep.subr.mxu0 0.0
    %328 = vmatpush1.xpose.msra.mxu0 0.0
    %329 = vmatprep.subr.mxu0 0.0
    %330 = vmatpush1.xpose.msra.mxu0 0.0
    %331 = vmatprep.subr.mxu0 0.0
    %332 = vmatpush1.xpose.msra.mxu0 0.0
    %333 = vmatprep.subr.mxu0 0.0
    %334 = vmatpush1.xpose.msra.mxu0 0.0
    %335 = vmatprep.subr.mxu0 0.0
    %336 = vmatpush1.xpose.msra.mxu0 0.0
    %337 = vmatprep.subr.mxu0 0.0
    %338 = vmatpush1.xpose.msra.mxu0 0.0
    %339 = vmatprep.subr.mxu0 0.0
    %340 = vmatpush1.xpose.msra.mxu0 0.0
    %341 = vmatprep.subr.mxu0 0.0
    %342 = vmatpush1.xpose.msra.mxu0 0.0
    %343 = vmatprep.subr.mxu0 0.0
    %344 = vmatpush1.xpose.msra.mxu0 0.0
    %345 = vmatprep.subr.mxu0 0.0
    %346 = vmatpush1.xpose.msra.mxu0 0.0
    %347 = vmatprep.subr.mxu0 0.0
    %348 = vmatpush1.xpose.msra.mxu0 0.0
    %349 = vmatprep.subr.mxu0 0.0
    %350 = vmatpush1.xpose.msra.mxu0 0.0
    %351 = vmatprep.subr.mxu0 0.0
    %352 = vmatpush1.xpose.msra.mxu0 0.0
    %353 = vmatprep.subr.mxu0 0.0
    %354 = vmatpush1.xpose.msra.mxu0 0.0
    %355 = vmatprep.subr.mxu0 0.0
    %356 = vmatpush1.xpose.msra.mxu0 0.0
    %357 = vmatprep.subr.mxu0 0.0
    %358 = vmatpush1.xpose.msra.mxu0 0.0
    %359 = vmatprep.subr.mxu0 0.0
    %360 = vmatpush1.xpose.msra.mxu0 0.0
    %361 = vmatprep.subr.mxu0 0.0
    %362 = vmatpush1.xpose.msra.mxu0 0.0
    %363 = vmatprep.subr.mxu0 0.0
    %364 = vmatpush1.xpose.msra.mxu0 0.0
    %365 = vmatprep.subr.mxu0 0.0
    %366 = vmatpush1.xpose.msra.mxu0 0.0
    %367 = vmatprep.subr.mxu0 0.0
    %368 = vmatpush1.xpose.msra.mxu0 0.0
    %369 = vmatprep.subr.mxu0 0.0
    %370 = vmatpush1.xpose.msra.mxu0 0.0
    %371 = vmatprep.subr.mxu0 0.0
    %372 = vmatpush1.xpose.msra.mxu0 0.0
    %373 = vmatprep.subr.mxu0 0.0
    %374 = vmatpush1.xpose.msra.mxu0 0.0
    %375 = vmatprep.subr.mxu0 0.0
    %376 = vmatpush1.xpose.msra.mxu0 0.0
    %377 = vmatprep.subr.mxu0 0.0
    %378 = vmatpush1.xpose.msra.mxu0 0.0
    %379 = vmatprep.subr.mxu0 0.0
    %380 = vmatpush1.xpose.msra.mxu0 0.0
    %381 = vmatprep.subr.mxu0 0.0
    %382 = vmatpush1.xpose.msra.mxu0 0.0
    %383 = vmatprep.subr.mxu0 0.0
    %384 = vmatpush1.xpose.msra.mxu0 0.0
    %385 = vmatprep.mubr.f32.mxu0 0.0
    %386 = vmatmul.mubr.f32.gmra.mrb[0].mxu0 %v317
    %v387 = vpop.f32.mrb[0].mxu0
    %v388 = vadd.f32 %v53, %v387
    %v389 = vpop.f32.mrb[0].mxu0
    %390 = vdwg.mxu0
    %v391 = vsel %vm225, %v388, -inf
    %392 = vmax.xlane.f32.xlu0 %v391
    %v393 = vpop.xlane.xlu0 %392
    %v394 = vsub.f32 %v388, %v393
    %v395 = vmul.f32 %v394, 1.442695
    %v396 = vpow.pop %v395
    %v397 = vsel %vm225, %v396, 0.0
    %398 = vadd.xlane.f32.xlu0 %v397
    %v399 = vpop.xlane.xlu0 %398
    %v400 = vrcp.pop %v399
    %v401 = vmul.f32 %v396, %v400
    %402 = vrot.lane.b32.xlu0 %v141, 64
    %v403 = vpop.permute.xlu0 %402
    %v406 = vsel %vm225, %v401, 0
    %408 = vmatprep.subr.mxu0 0.0
    %409 = vmatpush1.msra.mxu0 %v403
    %410 = vmatprep.subr.mxu0 0.0
    %411 = vmatpush1.msra.mxu0 0.0
    %412 = vmatprep.subr.mxu0 0.0
    %413 = vmatpush1.msra.mxu0 0.0
    %414 = vmatprep.subr.mxu0 0.0
    %415 = vmatpush1.msra.mxu0 0.0
    %416 = vmatprep.subr.mxu0 0.0
    %417 = vmatpush1.msra.mxu0 0.0
    %418 = vmatprep.subr.mxu0 0.0
    %419 = vmatpush1.msra.mxu0 0.0
    %420 = vmatprep.subr.mxu0 0.0
    %421 = vmatpush1.msra.mxu0 0.0
    %422 = vmatprep.subr.mxu0 0.0
    %423 = vmatpush1.msra.mxu0 0.0
    %424 = vmatprep.subr.mxu0 0.0
    %425 = vmatpush1.msra.mxu0 0.0
    %426 = vmatprep.subr.mxu0 0.0
    %427 = vmatpush1.msra.mxu0 0.0
    %428 = vmatprep.subr.mxu0 0.0
    %429 = vmatpush1.msra.mxu0 0.0
    %430 = vmatprep.subr.mxu0 0.0
    %431 = vmatpush1.msra.mxu0 0.0
    %432 = vmatprep.subr.mxu0 0.0
    %433 = vmatpush1.msra.mxu0 0.0
    %434 = vmatprep.subr.mxu0 0.0
    %435 = vmatpush1.msra.mxu0 0.0
    %436 = vmatprep.subr.mxu0 0.0
    %437 = vmatpush1.msra.mxu0 0.0
    %438 = vmatprep.subr.mxu0 0.0
    %439 = vmatpush1.msra.mxu0 0.0
    %440 = vmatprep.subr.mxu0 0.0
    %441 = vmatpush1.msra.mxu0 0.0
    %442 = vmatprep.subr.mxu0 0.0
    %443 = vmatpush1.msra.mxu0 0.0
    %444 = vmatprep.subr.mxu0 0.0
    %445 = vmatpush1.msra.mxu0 0.0
    %446 = vmatprep.subr.mxu0 0.0
    %447 = vmatpush1.msra.mxu0 0.0
    %448 = vmatprep.subr.mxu0 0.0
    %449 = vmatpush1.msra.mxu0 0.0
    %450 = vmatprep.subr.mxu0 0.0
    %451 = vmatpush1.msra.mxu0 0.0
    %452 = vmatprep.subr.mxu0 0.0
    %453 = vmatpush1.msra.mxu0 0.0
    %454 = vmatprep.subr.mxu0 0.0
    %455 = vmatpush1.msra.mxu0 0.0
    %456 = vmatprep.subr.mxu0 0.0
    %457 = vmatpush1.msra.mxu0 0.0
    %458 = vmatprep.subr.mxu0 0.0
    %459 = vmatpush1.msra.mxu0 0.0
    %460 = vmatprep.subr.mxu0 0.0
    %461 = vmatpush1.msra.mxu0 0.0
    %462 = vmatprep.subr.mxu0 0.0
    %463 = vmatpush1.msra.mxu0 0.0
    %464 = vmatprep.subr.mxu0 0.0
    %465 = vmatpush1.msra.mxu0 0.0
    %466 = vmatprep.subr.mxu0 0.0
    %467 = vmatpush1.msra.mxu0 0.0
    %468 = vmatprep.subr.mxu0 0.0
    %469 = vmatpush1.msra.mxu0 0.0
    %470 = vmatprep.subr.mxu0 0.0
    %471 = vmatpush1.msra.mxu0 0.0
    %472 = vmatprep.mubr.f32.mxu0 0.0
    %473 = vmatmul.mubr.f32.gmra.mrb[0].mxu0 %v406
    %v474 = vpop.f32.mrb[0].mxu0
    %v475 = vadd.f32 0.0, %v474
    %v476 = vpop.f32.mrb[0].mxu0
    %477 = vdwg.mxu0
    %478 = vrot.lane.b32.xlu0 %v144, 112
    %v479 = vpop.permute.xlu0 %478
    %480 = vrot.lane.b32.xlu0 %v136, 80
    %v481 = vpop.permute.xlu0 %480
    %v482 = vsel %vm149, %v479, 0
    %v484 = vsel %vm149, %v481, 0
    %486 = vmatprep.subr.mxu0 0.0
    %487 = vmatpush1.xpose.msra.mxu0 %v484
    %488 = vmatprep.subr.mxu0 0.0
    %489 = vmatpush1.xpose.msra.mxu0 0.0
    %490 = vmatprep.subr.mxu0 0.0
    %491 = vmatpush1.xpose.msra.mxu0 0.0
    %492 = vmatprep.subr.mxu0 0.0
    %493 = vmatpush1.xpose.msra.mxu0 0.0
    %494 = vmatprep.subr.mxu0 0.0
    %495 = vmatpush1.xpose.msra.mxu0 0.0
    %496 = vmatprep.subr.mxu0 0.0
    %497 = vmatpush1.xpose.msra.mxu0 0.0
    %498 = vmatprep.subr.mxu0 0.0
    %499 = vmatpush1.xpose.msra.mxu0 0.0
    %500 = vmatprep.subr.mxu0 0.0
    %501 = vmatpush1.xpose.msra.mxu0 0.0
    %502 = vmatprep.subr.mxu0 0.0
    %503 = vmatpush1.xpose.msra.mxu0 0.0
    %504 = vmatprep.subr.mxu0 0.0
    %505 = vmatpush1.xpose.msra.mxu0 0.0
    %506 = vmatprep.subr.mxu0 0.0
    %507 = vmatpush1.xpose.msra.mxu0 0.0
    %508 = vmatprep.subr.mxu0 0.0
    %509 = vmatpush1.xpose.msra.mxu0 0.0
    %510 = vmatprep.subr.mxu0 0.0
    %511 = vmatpush1.xpose.msra.mxu0 0.0
    %512 = vmatprep.subr.mxu0 0.0
    %513 = vmatpush1.xpose.msra.mxu0 0.0
    %514 = vmatprep.subr.mxu0 0.0
    %515 = vmatpush1.xpose.msra.mxu0 0.0
    %516 = vmatprep.subr.mxu0 0.0
    %517 = vmatpush1.xpose.msra.mxu0 0.0
    %518 = vmatprep.subr.mxu0 0.0
    %519 = vmatpush1.xpose.msra.mxu0 0.0
    %520 = vmatprep.subr.mxu0 0.0
    %521 = vmatpush1.xpose.msra.mxu0 0.0
    %522 = vmatprep.subr.mxu0 0.0
    %523 = vmatpush1.xpose.msra.mxu0 0.0
    %524 = vmatprep.subr.mxu0 0.0
    %525 = vmatpush1.xpose.msra.mxu0 0.0
    %526 = vmatprep.subr.mxu0 0.0
    %527 = vmatpush1.xpose.msra.mxu0 0.0
    %528 = vmatprep.subr.mxu0 0.0
    %529 = vmatpush1.xpose.msra.mxu0 0.0
    %530 = vmatprep.subr.mxu0 0.0
    %531 = vmatpush1.xpose.msra.mxu0 0.0
    %532 = vmatprep.subr.mxu0 0.0
    %533 = vmatpush1.xpose.msra.mxu0 0.0
    %534 = vmatprep.subr.mxu0 0.0
    %535 = vmatpush1.xpose.msra.mxu0 0.0
    %536 = vmatprep.subr.mxu0 0.0
    %537 = vmatpush1.xpose.msra.mxu0 0.0
    %538 = vmatprep.subr.mxu0 0.0
    %539 = vmatpush1.xpose.msra.mxu0 0.0
    %540 = vmatprep.subr.mxu0 0.0
    %541 = vmatpush1.xpose.msra.mxu0 0.0
    %542 = vmatprep.subr.mxu0 0.0
    %543 = vmatpush1.xpose.msra.mxu0 0.0
    %544 = vmatprep.subr.mxu0 0.0
    %545 = vmatpush1.xpose.msra.mxu0 0.0
    %546 = vmatprep.subr.mxu0 0.0
    %547 = vmatpush1.xpose.msra.mxu0 0.0
    %548 = vmatprep.subr.mxu0 0.0
    %549 = vmatpush1.xpose.msra.mxu0 0.0
    %550 = vmatprep.mubr.f32.mxu0 0.0
    %551 = vmatmul.mubr.f32.gmra.mrb[0].mxu0 %v482
    %v552 = vpop.f32.mrb[0].mxu0
    %v553 = vadd.f32 %v49, %v552
    %v554 = vpop.f32.mrb[0].mxu0
    %555 = vdwg.mxu0
    %v556 = vsel %vm225, %v553, -inf
    %557 = vmax.xlane.f32.xlu0 %v556
    %v558 = vpop.xlane.xlu0 %557
    %v559 = vsub.f32 %v553, %v558
    %v560 = vmul.f32 %v559, 1.442695
    %v561 = vpow.pop %v560
    %v562 = vsel %vm225, %v561, 0.0
    %563 = vadd.xlane.f32.xlu0 %v562
    %v564 = vpop.xlane.xlu0 %563
    %v565 = vrcp.pop %v564
    %v566 = vmul.f32 %v561, %v565
    %567 = vrot.lane.b32.xlu0 %v136, 48
    %v568 = vpop.permute.xlu0 %567
    %v571 = vsel %vm225, %v566, 0
    %573 = vmatprep.subr.mxu0 0.0
    %574 = vmatpush1.msra.mxu0 %v568
    %575 = vmatprep.subr.mxu0 0.0
    %576 = vmatpush1.msra.mxu0 0.0
    %577 = vmatprep.subr.mxu0 0.0
    %578 = vmatpush1.msra.mxu0 0.0
    %579 = vmatprep.subr.mxu0 0.0
    %580 = vmatpush1.msra.mxu0 0.0
    %581 = vmatprep.subr.mxu0 0.0
    %582 = vmatpush1.msra.mxu0 0.0
    %583 = vmatprep.subr.mxu0 0.0
    %584 = vmatpush1.msra.mxu0 0.0
    %585 = vmatprep.subr.mxu0 0.0
    %586 = vmatpush1.msra.mxu0 0.0
    %587 = vmatprep.subr.mxu0 0.0
    %588 = vmatpush1.msra.mxu0 0.0
    %589 = vmatprep.subr.mxu0 0.0
    %590 = vmatpush1.msra.mxu0 0.0
    %591 = vmatprep.subr.mxu0 0.0
    %592 = vmatpush1.msra.mxu0 0.0
    %593 = vmatprep.subr.mxu0 0.0
    %594 = vmatpush1.msra.mxu0 0.0
    %595 = vmatprep.subr.mxu0 0.0
    %596 = vmatpush1.msra.mxu0 0.0
    %597 = vmatprep.subr.mxu0 0.0
    %598 = vmatpush1.msra.mxu0 0.0
    %599 = vmatprep.subr.mxu0 0.0
    %600 = vmatpush1.msra.mxu0 0.0
    %601 = vmatprep.subr.mxu0 0.0
    %602 = vmatpush1.msra.mxu0 0.0
    %603 = vmatprep.subr.mxu0 0.0
    %604 = vmatpush1.msra.mxu0 0.0
    %605 = vmatprep.subr.mxu0 0.0
    %606 = vmatpush1.msra.mxu0 0.0
    %607 = vmatprep.subr.mxu0 0.0
    %608 = vmatpush1.msra.mxu0 0.0
    %609 = vmatprep.subr.mxu0 0.0
    %610 = vmatpush1.msra.mxu0 0.0
    %611 = vmatprep.subr.mxu0 0.0
    %612 = vmatpush1.msra.mxu0 0.0
    %613 = vmatprep.subr.mxu0 0.0
    %614 = vmatpush1.msra.mxu0 0.0
    %615 = vmatprep.subr.mxu0 0.0
    %616 = vmatpush1.msra.mxu0 0.0
    %617 = vmatprep.subr.mxu0 0.0
    %618 = vmatpush1.msra.mxu0 0.0
    %619 = vmatprep.subr.mxu0 0.0
    %620 = vmatpush1.msra.mxu0 0.0
    %621 = vmatprep.subr.mxu0 0.0
    %622 = vmatpush1.msra.mxu0 0.0
    %623 = vmatprep.subr.mxu0 0.0
    %624 = vmatpush1.msra.mxu0 0.0
    %625 = vmatprep.subr.mxu0 0.0
    %626 = vmatpush1.msra.mxu0 0.0
    %627 = vmatprep.subr.mxu0 0.0
    %628 = vmatpush1.msra.mxu0 0.0
    %629 = vmatprep.subr.mxu0 0.0
    %630 = vmatpush1.msra.mxu0 0.0
    %631 = vmatprep.subr.mxu0 0.0
    %632 = vmatpush1.msra.mxu0 0.0
    %633 = vmatprep.subr.mxu0 0.0
    %634 = vmatpush1.msra.mxu0 0.0
    %635 = vmatprep.subr.mxu0 0.0
    %636 = vmatpush1.msra.mxu0 0.0
    %637 = vmatprep.mubr.f32.mxu0 0.0
    %638 = vmatmul.mubr.f32.gmra.mrb[0].mxu0 %v571
    %v639 = vpop.f32.mrb[0].mxu0
    %v640 = vadd.f32 0.0, %v639
    %v641 = vpop.f32.mrb[0].mxu0
    %642 = vdwg.mxu0
    %643 = vrot.lane.b32.xlu0 %v145, 112
    %v644 = vpop.permute.xlu0 %643
    %645 = vrot.lane.b32.xlu0 %v141, 80
    %v646 = vpop.permute.xlu0 %645
    %v647 = vsel %vm149, %v644, 0
    %v649 = vsel %vm149, %v646, 0
    %651 = vmatprep.subr.mxu0 0.0
    %652 = vmatpush1.xpose.msra.mxu0 %v649
    %653 = vmatprep.subr.mxu0 0.0
    %654 = vmatpush1.xpose.msra.mxu0 0.0
    %655 = vmatprep.subr.mxu0 0.0
    %656 = vmatpush1.xpose.msra.mxu0 0.0
    %657 = vmatprep.subr.mxu0 0.0
    %658 = vmatpush1.xpose.msra.mxu0 0.0
    %659 = vmatprep.subr.mxu0 0.0
    %660 = vmatpush1.xpose.msra.mxu0 0.0
    %661 = vmatprep.subr.mxu0 0.0
    %662 = vmatpush1.xpose.msra.mxu0 0.0
    %663 = vmatprep.subr.mxu0 0.0
    %664 = vmatpush1.xpose.msra.mxu0 0.0
    %665 = vmatprep.subr.mxu0 0.0
    %666 = vmatpush1.xpose.msra.mxu0 0.0
    %667 = vmatprep.subr.mxu0 0.0
    %668 = vmatpush1.xpose.msra.mxu0 0.0
    %669 = vmatprep.subr.mxu0 0.0
    %670 = vmatpush1.xpose.msra.mxu0 0.0
    %671 = vmatprep.subr.mxu0 0.0
    %672 = vmatpush1.xpose.msra.mxu0 0.0
    %673 = vmatprep.subr.mxu0 0.0
    %674 = vmatpush1.xpose.msra.mxu0 0.0
    %675 = vmatprep.subr.mxu0 0.0
    %676 = vmatpush1.xpose.msra.mxu0 0.0
    %677 = vmatprep.subr.mxu0 0.0
    %678 = vmatpush1.xpose.msra.mxu0 0.0
    %679 = vmatprep.subr.mxu0 0.0
    %680 = vmatpush1.xpose.msra.mxu0 0.0
    %681 = vmatprep.subr.mxu0 0.0
    %682 = vmatpush1.xpose.msra.mxu0 0.0
    %683 = vmatprep.subr.mxu0 0.0
    %684 = vmatpush1.xpose.msra.mxu0 0.0
    %685 = vmatprep.subr.mxu0 0.0
    %686 = vmatpush1.xpose.msra.mxu0 0.0
    %687 = vmatprep.subr.mxu0 0.0
    %688 = vmatpush1.xpose.msra.mxu0 0.0
    %689 = vmatprep.subr.mxu0 0.0
    %690 = vmatpush1.xpose.msra.mxu0 0.0
    %691 = vmatprep.subr.mxu0 0.0
    %692 = vmatpush1.xpose.msra.mxu0 0.0
    %693 = vmatprep.subr.mxu0 0.0
    %694 = vmatpush1.xpose.msra.mxu0 0.0
    %695 = vmatprep.subr.mxu0 0.0
    %696 = vmatpush1.xpose.msra.mxu0 0.0
    %697 = vmatprep.subr.mxu0 0.0
    %698 = vmatpush1.xpose.msra.mxu0 0.0
    %699 = vmatprep.subr.mxu0 0.0
    %700 = vmatpush1.xpose.msra.mxu0 0.0
    %701 = vmatprep.subr.mxu0 0.0
    %702 = vmatpush1.xpose.msra.mxu0 0.0
    %703 = vmatprep.subr.mxu0 0.0
    %704 = vmatpush1.xpose.msra.mxu0 0.0
    %705 = vmatprep.subr.mxu0 0.0
    %706 = vmatpush1.xpose.msra.mxu0 0.0
    %707 = vmatprep.subr.mxu0 0.0
    %708 = vmatpush1.xpose.msra.mxu0 0.0
    %709 = vmatprep.subr.mxu0 0.0
    %710 = vmatpush1.xpose.msra.mxu0 0.0
    %711 = vmatprep.subr.mxu0 0.0
    %712 = vmatpush1.xpose.msra.mxu0 0.0
    %713 = vmatprep.subr.mxu0 0.0
    %714 = vmatpush1.xpose.msra.mxu0 0.0
    %715 = vmatprep.mubr.f32.mxu0 0.0
    %716 = vmatmul.mubr.f32.gmra.mrb[0].mxu0 %v647
    %v717 = vpop.f32.mrb[0].mxu0
    %v718 = vadd.f32 %v53, %v717
    %v719 = vpop.f32.mrb[0].mxu0
    %720 = vdwg.mxu0
    %v721 = vsel %vm225, %v718, -inf
    %722 = vmax.xlane.f32.xlu0 %v721
    %v723 = vpop.xlane.xlu0 %722
    %v724 = vsub.f32 %v718, %v723
    %v725 = vmul.f32 %v724, 1.442695
    %v726 = vpow.pop %v725
    %v727 = vsel %vm225, %v726, 0.0
    %728 = vadd.xlane.f32.xlu0 %v727
    %v729 = vpop.xlane.xlu0 %728
    %v730 = vrcp.pop %v729
    %v731 = vmul.f32 %v726, %v730
    %732 = vrot.lane.b32.xlu0 %v141, 48
    %v733 = vpop.permute.xlu0 %732
    %v736 = vsel %vm225, %v731, 0
    %738 = vmatprep.subr.mxu0 0.0
    %739 = vmatpush1.msra.mxu0 %v733
    %740 = vmatprep.subr.mxu0 0.0
    %741 = vmatpush1.msra.mxu0 0.0
    %742 = vmatprep.subr.mxu0 0.0
    %743 = vmatpush1.msra.mxu0 0.0
    %744 = vmatprep.subr.mxu0 0.0
    %745 = vmatpush1.msra.mxu0 0.0
    %746 = vmatprep.subr.mxu0 0.0
    %747 = vmatpush1.msra.mxu0 0.0
    %748 = vmatprep.subr.mxu0 0.0
    %749 = vmatpush1.msra.mxu0 0.0
    %750 = vmatprep.subr.mxu0 0.0
    %751 = vmatpush1.msra.mxu0 0.0
    %752 = vmatprep.subr.mxu0 0.0
    %753 = vmatpush1.msra.mxu0 0.0
    %754 = vmatprep.subr.mxu0 0.0
    %755 = vmatpush1.msra.mxu0 0.0
    %756 = vmatprep.subr.mxu0 0.0
    %757 = vmatpush1.msra.mxu0 0.0
    %758 = vmatprep.subr.mxu0 0.0
    %759 = vmatpush1.msra.mxu0 0.0
    %760 = vmatprep.subr.mxu0 0.0
    %761 = vmatpush1.msra.mxu0 0.0
    %762 = vmatprep.subr.mxu0 0.0
    %763 = vmatpush1.msra.mxu0 0.0
    %764 = vmatprep.subr.mxu0 0.0
    %765 = vmatpush1.msra.mxu0 0.0
    %766 = vmatprep.subr.mxu0 0.0
    %767 = vmatpush1.msra.mxu0 0.0
    %768 = vmatprep.subr.mxu0 0.0
    %769 = vmatpush1.msra.mxu0 0.0
    %770 = vmatprep.subr.mxu0 0.0
    %771 = vmatpush1.msra.mxu0 0.0
    %772 = vmatprep.subr.mxu0 0.0
    %773 = vmatpush1.msra.mxu0 0.0
    %774 = vmatprep.subr.mxu0 0.0
    %775 = vmatpush1.msra.mxu0 0.0
    %776 = vmatprep.subr.mxu0 0.0
    %777 = vmatpush1.msra.mxu0 0.0
    %778 = vmatprep.subr.mxu0 0.0
    %779 = vmatpush1.msra.mxu0 0.0
    %780 = vmatprep.subr.mxu0 0.0
    %781 = vmatpush1.msra.mxu0 0.0
    %782 = vmatprep.subr.mxu0 0.0
    %783 = vmatpush1.msra.mxu0 0.0
    %784 = vmatprep.subr.mxu0 0.0
    %785 = vmatpush1.msra.mxu0 0.0
    %786 = vmatprep.subr.mxu0 0.0
    %787 = vmatpush1.msra.mxu0 0.0
    %788 = vmatprep.subr.mxu0 0.0
    %789 = vmatpush1.msra.mxu0 0.0
    %790 = vmatprep.subr.mxu0 0.0
    %791 = vmatpush1.msra.mxu0 0.0
    %792 = vmatprep.subr.mxu0 0.0
    %793 = vmatpush1.msra.mxu0 0.0
    %794 = vmatprep.subr.mxu0 0.0
    %795 = vmatpush1.msra.mxu0 0.0
    %796 = vmatprep.subr.mxu0 0.0
    %797 = vmatpush1.msra.mxu0 0.0
    %798 = vmatprep.subr.mxu0 0.0
    %799 = vmatpush1.msra.mxu0 0.0
    %800 = vmatprep.subr.mxu0 0.0
    %801 = vmatpush1.msra.mxu0 0.0
    %802 = vmatprep.mubr.f32.mxu0 0.0
    %803 = vmatmul.mubr.f32.gmra.mrb[0].mxu0 %v736
    %v804 = vpop.f32.mrb[0].mxu0
    %v805 = vadd.f32 0.0, %v804
    %v806 = vpop.f32.mrb[0].mxu0
    %807 = vdwg.mxu0
    %810 = vrot.lane.b32.xlu0 %v640, 16
    %v811 = vpop.permute.xlu0 %810
    %812 = vrot.lane.b32.xlu0 %v805, 16
    %v813 = vpop.permute.xlu0 %812
    %v816 = vsel %vm149, %v310, %v811
    %v817 = vsel %vm149, %v475, %v813
    %v818 = vld [vmem:[%s3] sm:$0xff]
    %v819 = vld [vmem:[%s3 + $0x8] sm:$0xff]
    %v820 = vld [vmem:[%s3 + $0x10] sm:$0xff]
    %v821 = vld [vmem:[%s3 + $0x18] sm:$0xff]
    %v822 = vlaneseq
    %v823 = vshrl.u32 %v822, 7
    %v824 = vsub.s32 2, %v823
    %v825 = vrot.slane %v43, %v824
    %v827 = vsel %vm62, %v816, 0
    %v830 = vsel %vm62, %v817, 0
    %832 = vmatprep.subr.mxu0 0.0
    %833 = vmatpush1.msra.mxu0 %v818
    %834 = vmatprep.subr.mxu0 0.0
    %835 = vmatpush1.msra.mxu0 %v819
    %836 = vmatprep.subr.mxu0 0.0
    %837 = vmatpush1.msra.mxu0 %v820
    %838 = vmatprep.subr.mxu0 0.0
    %839 = vmatpush1.msra.mxu0 %v821
    %840 = vmatprep.subr.mxu0 0.0
    %841 = vmatpush1.msra.mxu0 0.0
    %842 = vmatprep.subr.mxu0 0.0
    %843 = vmatpush1.msra.mxu0 0.0
    %844 = vmatprep.subr.mxu0 0.0
    %845 = vmatpush1.msra.mxu0 0.0
    %846 = vmatprep.subr.mxu0 0.0
    %847 = vmatpush1.msra.mxu0 0.0
    %848 = vmatprep.subr.mxu0 0.0
    %849 = vmatpush1.msra.mxu0 0.0
    %850 = vmatprep.subr.mxu0 0.0
    %851 = vmatpush1.msra.mxu0 0.0
    %852 = vmatprep.subr.mxu0 0.0
    %853 = vmatpush1.msra.mxu0 0.0
    %854 = vmatprep.subr.mxu0 0.0
    %855 = vmatpush1.msra.mxu0 0.0
    %856 = vmatprep.subr.mxu0 0.0
    %857 = vmatpush1.msra.mxu0 0.0
    %858 = vmatprep.subr.mxu0 0.0
    %859 = vmatpush1.msra.mxu0 0.0
    %860 = vmatprep.subr.mxu0 0.0
    %861 = vmatpush1.msra.mxu0 0.0
    %862 = vmatprep.subr.mxu0 0.0
    %863 = vmatpush1.msra.mxu0 0.0
    %864 = vmatprep.subr.mxu0 0.0
    %865 = vmatpush1.msra.mxu0 0.0
    %866 = vmatprep.subr.mxu0 0.0
    %867 = vmatpush1.msra.mxu0 0.0
    %868 = vmatprep.subr.mxu0 0.0
    %869 = vmatpush1.msra.mxu0 0.0
    %870 = vmatprep.subr.mxu0 0.0
    %871 = vmatpush1.msra.mxu0 0.0
    %872 = vmatprep.subr.mxu0 0.0
    %873 = vmatpush1.msra.mxu0 0.0
    %874 = vmatprep.subr.mxu0 0.0
    %875 = vmatpush1.msra.mxu0 0.0
    %876 = vmatprep.subr.mxu0 0.0
    %877 = vmatpush1.msra.mxu0 0.0
    %878 = vmatprep.subr.mxu0 0.0
    %879 = vmatpush1.msra.mxu0 0.0
    %880 = vmatprep.subr.mxu0 0.0
    %881 = vmatpush1.msra.mxu0 0.0
    %882 = vmatprep.subr.mxu0 0.0
    %883 = vmatpush1.msra.mxu0 0.0
    %884 = vmatprep.subr.mxu0 0.0
    %885 = vmatpush1.msra.mxu0 0.0
    %886 = vmatprep.subr.mxu0 0.0
    %887 = vmatpush1.msra.mxu0 0.0
    %888 = vmatprep.subr.mxu0 0.0
    %889 = vmatpush1.msra.mxu0 0.0
    %890 = vmatprep.subr.mxu0 0.0
    %891 = vmatpush1.msra.mxu0 0.0
    %892 = vmatprep.subr.mxu0 0.0
    %893 = vmatpush1.msra.mxu0 0.0
    %894 = vmatprep.subr.mxu0 0.0
    %895 = vmatpush1.msra.mxu0 0.0
    %896 = vmatprep.mubr.f32.mxu0 0.0
    %897 = vmatmul.mubr.f32.gmra.mrb[0].mxu0 %v827
    %v898 = vpop.f32.mrb[0].mxu0
    %v899 = vadd.f32 %v825, %v898
    %v900 = vpop.f32.mrb[0].mxu0
    %901 = vmatprep.mubr.f32.mxu0 0.0
    %902 = vmatmul.mubr.f32.gmra.mrb[0].mxu0 %v830
    %v903 = vpop.f32.mrb[0].mxu0
    %v904 = vadd.f32 %v825, %v903
    %v905 = vpop.f32.mrb[0].mxu0
    %906 = vdwg.mxu0
    %v907 = vadd.f32 %v41, %v899
    %v908 = vadd.f32 %v42, %v904
    %v909 = vsel %vm62, %v907, 0.0
    %910 = vadd.xlane.f32.xlu0 %v909
    %v911 = vpop.xlane.xlu0 %910
    %v912 = vsel %vm62, %v908, 0.0
    %913 = vadd.xlane.f32.xlu0 %v912
    %v914 = vpop.xlane.xlu0 %913
    %v915 = vrcp.pop 32.0
    %v916 = vmul.f32 %v911, %v915
    %v917 = vmul.f32 %v914, %v915
    %v918 = vsub.f32 %v907, %v916
    %v919 = vsub.f32 %v908, %v917
    %v920 = vmul.f32 %v918, %v918
    %v921 = vmul.f32 %v919, %v919
    %v922 = vsel %vm62, %v920, 0.0
    %923 = vadd.xlane.f32.xlu0 %v922
    %v924 = vpop.xlane.xlu0 %923
    %v925 = vsel %vm62, %v921, 0.0
    %926 = vadd.xlane.f32.xlu0 %v925
    %v927 = vpop.xlane.xlu0 %926
    %v928 = vmul.f32 %v924, %v915
    %v929 = vmul.f32 %v927, %v915
    %v930 = vadd.f32 %v928, 1e-05
    %v931 = vadd.f32 %v929, 1e-05
    %v932 = vrsqrt.pop %v930
    %v933 = vrsqrt.pop %v931
    %v934 = vmul.f32 %v918, %v932
    %v935 = vmul.f32 %v919, %v933
    %v936 = vlaneseq
    %v937 = vshrl.u32 %v936, 7
    %v938 = vsub.s32 4, %v937
    %v939 = vrot.slane %v43, %v938
    %v940 = vmul.f32 %v934, %v939
    %v941 = vmul.f32 %v935, %v939
    %v942 = vlaneseq
    %v943 = vshrl.u32 %v942, 7
    %v944 = vsub.s32 5, %v943
    %v945 = vrot.slane %v43, %v944
    %v946 = vadd.f32 %v940, %v945
    %v947 = vadd.f32 %v941, %v945
    %v948 = vld [vmem:[%s4] sm:$0xff]
    %v949 = vld [vmem:[%s4 + $0x8] sm:$0xff]
    %v950 = vld [vmem:[%s4 + $0x10] sm:$0xff]
    %v951 = vld [vmem:[%s4 + $0x18] sm:$0xff]
    %v952 = vlaneseq
    %v953 = vshrl.u32 %v952, 7
    %v954 = vsub.s32 1, %v953
    %v955 = vrot.slane %v43, %v954
    %v957 = vsel %vm62, %v946, 0
    %v960 = vsel %vm62, %v947, 0
    %962 = vmatprep.subr.mxu0 0.0
    %963 = vmatpush1.msra.mxu0 %v948
    %964 = vmatprep.subr.mxu0 0.0
    %965 = vmatpush1.msra.mxu0 %v949
    %966 = vmatprep.subr.mxu0 0.0
    %967 = vmatpush1.msra.mxu0 %v950
    %968 = vmatprep.subr.mxu0 0.0
    %969 = vmatpush1.msra.mxu0 %v951
    %970 = vmatprep.subr.mxu0 0.0
    %971 = vmatpush1.msra.mxu0 0.0
    %972 = vmatprep.subr.mxu0 0.0
    %973 = vmatpush1.msra.mxu0 0.0
    %974 = vmatprep.subr.mxu0 0.0
    %975 = vmatpush1.msra.mxu0 0.0
    %976 = vmatprep.subr.mxu0 0.0
    %977 = vmatpush1.msra.mxu0 0.0
    %978 = vmatprep.subr.mxu0 0.0
    %979 = vmatpush1.msra.mxu0 0.0
    %980 = vmatprep.subr.mxu0 0.0
    %981 = vmatpush1.msra.mxu0 0.0
    %982 = vmatprep.subr.mxu0 0.0
    %983 = vmatpush1.msra.mxu0 0.0
    %984 = vmatprep.subr.mxu0 0.0
    %985 = vmatpush1.msra.mxu0 0.0
    %986 = vmatprep.subr.mxu0 0.0
    %987 = vmatpush1.msra.mxu0 0.0
    %988 = vmatprep.subr.mxu0 0.0
    %989 = vmatpush1.msra.mxu0 0.0
    %990 = vmatprep.subr.mxu0 0.0
    %991 = vmatpush1.msra.mxu0 0.0
    %992 = vmatprep.subr.mxu0 0.0
    %993 = vmatpush1.msra.mxu0 0.0
    %994 = vmatprep.subr.mxu0 0.0
    %995 = vmatpush1.msra.mxu0 0.0
    %996 = vmatprep.subr.mxu0 0.0
    %997 = vmatpush1.msra.mxu0 0.0
    %998 = vmatprep.subr.mxu0 0.0
    %999 = vmatpush1.msra.mxu0 0.0
    %1000 = vmatprep.subr.mxu0 0.0
    %1001 = vmatpush1.msra.mxu0 0.0
    %1002 = vmatprep.subr.mxu0 0.0
    %1003 = vmatpush1.msra.mxu0 0.0
    %1004 = vmatprep.subr.mxu0 0.0
    %1005 = vmatpush1.msra.mxu0 0.0
    %1006 = vmatprep.subr.mxu0 0.0
    %1007 = vmatpush1.msra.mxu0 0.0
    %1008 = vmatprep.subr.mxu0 0.0
    %1009 = vmatpush1.msra.mxu0 0.0
    %1010 = vmatprep.subr.mxu0 0.0
    %1011 = vmatpush1.msra.mxu0 0.0
    %1012 = vmatprep.subr.mxu0 0.0
    %1013 = vmatpush1.msra.mxu0 0.0
    %1014 = vmatprep.subr.mxu0 0.0
    %1015 = vmatpush1.msra.mxu0 0.0
    %1016 = vmatprep.subr.mxu0 0.0
    %1017 = vmatpush1.msra.mxu0 0.0
    %1018 = vmatprep.subr.mxu0 0.0
    %1019 = vmatpush1.msra.mxu0 0.0
    %1020 = vmatprep.subr.mxu0 0.0
    %1021 = vmatpush1.msra.mxu0 0.0
    %1022 = vmatprep.subr.mxu0 0.0
    %1023 = vmatpush1.msra.mxu0 0.0
    %1024 = vmatprep.subr.mxu0 0.0
    %1025 = vmatpush1.msra.mxu0 0.0
    %1026 = vmatprep.mubr.f32.mxu0 0.0
    %1027 = vmatmul.mubr.f32.gmra.mrb[0].mxu0 %v957
    %v1028 = vpop.f32.mrb[0].mxu0
    %v1029 = vadd.f32 %v955, %v1028
    %v1030 = vpop.f32.mrb[0].mxu0
    %1031 = vmatprep.mubr.f32.mxu0 0.0
    %1032 = vmatmul.mubr.f32.gmra.mrb[0].mxu0 %v960
    %v1033 = vpop.f32.mrb[0].mxu0
    %v1034 = vadd.f32 %v955, %v1033
    %v1035 = vpop.f32.mrb[0].mxu0
    %1036 = vdwg.mxu0
    %v1037 = vmax.f32 %v1029, 0.0
    %v1038 = vmax.f32 %v1034, 0.0
    %v1039 = vld [vmem:[%s5] sm:$0xff]
    %v1040 = vld [vmem:[%s5 + $0x8] sm:$0xff]
    %v1041 = vld [vmem:[%s5 + $0x10] sm:$0xff]
    %v1042 = vld [vmem:[%s5 + $0x18] sm:$0xff]
    %v1043 = vld [vmem:[%s5 + $0x20] sm:$0xff]
    %v1044 = vld [vmem:[%s5 + $0x28] sm:$0xff]
    %v1045 = vld [vmem:[%s5 + $0x30] sm:$0xff]
    %v1046 = vld [vmem:[%s5 + $0x38] sm:$0xff]
    %v1047 = vlaneseq
    %v1048 = vshrl.u32 %v1047, 7
    %v1049 = vsub.s32 3, %v1048
    %v1050 = vrot.slane %v43, %v1049
    %vm1051 = vcmask 523264
    %v1053 = vsel %vm1051, %v1037, 0
    %v1056 = vsel %vm1051, %v1038, 0
    %1058 = vmatprep.subr.mxu0 0.0
    %1059 = vmatpush1.msra.mxu0 %v1039
    %1060 = vmatprep.subr.mxu0 0.0
    %1061 = vmatpush1.msra.mxu0 %v1040
    %1062 = vmatprep.subr.mxu0 0.0
    %1063 = vmatpush1.msra.mxu0 %v1041
    %1064 = vmatprep.subr.mxu0 0.0
    %1065 = vmatpush1.msra.mxu0 %v1042
    %1066 = vmatprep.subr.mxu0 0.0
    %1067 = vmatpush1.msra.mxu0 %v1043
    %1068 = vmatprep.subr.mxu0 0.0
    %1069 = vmatpush1.msra.mxu0 %v1044
    %1070 = vmatprep.subr.mxu0 0.0
    %1071 = vmatpush1.msra.mxu0 %v1045
    %1072 = vmatprep.subr.mxu0 0.0
    %1073 = vmatpush1.msra.mxu0 %v1046
    %1074 = vmatprep.subr.mxu0 0.0
    %1075 = vmatpush1.msra.mxu0 0.0
    %1076 = vmatprep.subr.mxu0 0.0
    %1077 = vmatpush1.msra.mxu0 0.0
    %1078 = vmatprep.subr.mxu0 0.0
    %1079 = vmatpush1.msra.mxu0 0.0
    %1080 = vmatprep.subr.mxu0 0.0
    %1081 = vmatpush1.msra.mxu0 0.0
    %1082 = vmatprep.subr.mxu0 0.0
    %1083 = vmatpush1.msra.mxu0 0.0
    %1084 = vmatprep.subr.mxu0 0.0
    %1085 = vmatpush1.msra.mxu0 0.0
    %1086 = vmatprep.subr.mxu0 0.0
    %1087 = vmatpush1.msra.mxu0 0.0
    %1088 = vmatprep.subr.mxu0 0.0
    %1089 = vmatpush1.msra.mxu0 0.0
    %1090 = vmatprep.subr.mxu0 0.0
    %1091 = vmatpush1.msra.mxu0 0.0
    %1092 = vmatprep.subr.mxu0 0.0
    %1093 = vmatpush1.msra.mxu0 0.0
    %1094 = vmatprep.subr.mxu0 0.0
    %1095 = vmatpush1.msra.mxu0 0.0
    %1096 = vmatprep.subr.mxu0 0.0
    %1097 = vmatpush1.msra.mxu0 0.0
    %1098 = vmatprep.subr.mxu0 0.0
    %1099 = vmatpush1.msra.mxu0 0.0
    %1100 = vmatprep.subr.mxu0 0.0
    %1101 = vmatpush1.msra.mxu0 0.0
    %1102 = vmatprep.subr.mxu0 0.0
    %1103 = vmatpush1.msra.mxu0 0.0
    %1104 = vmatprep.subr.mxu0 0.0
    %1105 = vmatpush1.msra.mxu0 0.0
    %1106 = vmatprep.subr.mxu0 0.0
    %1107 = vmatpush1.msra.mxu0 0.0
    %1108 = vmatprep.subr.mxu0 0.0
    %1109 = vmatpush1.msra.mxu0 0.0
    %1110 = vmatprep.subr.mxu0 0.0
    %1111 = vmatpush1.msra.mxu0 0.0
    %1112 = vmatprep.subr.mxu0 0.0
    %1113 = vmatpush1.msra.mxu0 0.0
    %1114 = vmatprep.subr.mxu0 0.0
    %1115 = vmatpush1.msra.mxu0 0.0
    %1116 = vmatprep.subr.mxu0 0.0
    %1117 = vmatpush1.msra.mxu0 0.0
    %1118 = vmatprep.subr.mxu0 0.0
    %1119 = vmatpush1.msra.mxu0 0.0
    %1120 = vmatprep.subr.mxu0 0.0
    %1121 = vmatpush1.msra.mxu0 0.0
    %1122 = vmatprep.mubr.f32.mxu0 0.0
    %1123 = vmatmul.mubr.f32.gmra.mrb[0].mxu0 %v1053
    %v1124 = vpop.f32.mrb[0].mxu0
    %v1125 = vadd.f32 %v1050, %v1124
    %v1126 = vpop.f32.mrb[0].mxu0
    %1127 = vmatprep.mubr.f32.mxu0 0.0
    %1128 = vmatmul.mubr.f32.gmra.mrb[0].mxu0 %v1056
    %v1129 = vpop.f32.mrb[0].mxu0
    %v1130 = vadd.f32 %v1050, %v1129
    %v1131 = vpop.f32.mrb[0].mxu0
    %1132 = vdwg.mxu0
    %v1133 = vadd.f32 %v946, %v1125
    %v1134 = vadd.f32 %v947, %v1130
    %v1135 = vsel %vm62, %v1133, 0.0
    %1136 = vadd.xlane.f32.xlu0 %v1135
    %v1137 = vpop.xlane.xlu0 %1136
    %v1138 = vsel %vm62, %v1134, 0.0
    %1139 = vadd.xlane.f32.xlu0 %v1138
    %v1140 = vpop.xlane.xlu0 %1139
    %v1141 = vmul.f32 %v1137, %v915
    %v1142 = vmul.f32 %v1140, %v915
    %v1143 = vsub.f32 %v1133, %v1141
    %v1144 = vsub.f32 %v1134, %v1142
    %v1145 = vmul.f32 %v1143, %v1143
    %v1146 = vmul.f32 %v1144, %v1144
    %v1147 = vsel %vm62, %v1145, 0.0
    %1148 = vadd.xlane.f32.xlu0 %v1147
    %v1149 = vpop.xlane.xlu0 %1148
    %v1150 = vsel %vm62, %v1146, 0.0
    %1151 = vadd.xlane.f32.xlu0 %v1150
    %v1152 = vpop.xlane.xlu0 %1151
    %v1153 = vmul.f32 %v1149, %v915
    %v1154 = vmul.f32 %v1152, %v915
    %v1155 = vadd.f32 %v1153, 1e-05
    %v1156 = vadd.f32 %v1154, 1e-05
    %v1157 = vrsqrt.pop %v1155
    %v1158 = vrsqrt.pop %v1156
    %v1159 = vmul.f32 %v1143, %v1157
    %v1160 = vmul.f32 %v1144, %v1158
    %v1161 = vlaneseq
    %v1162 = vshrl.u32 %v1161, 7
    %v1163 = vsub.s32 6, %v1162
    %v1164 = vrot.slane %v43, %v1163
    %v1165 = vmul.f32 %v1159, %v1164
    %v1166 = vmul.f32 %v1160, %v1164
    %v1167 = vlaneseq
    %v1168 = vshrl.u32 %v1167, 7
    %v1169 = vsub.s32 7, %v1168
    %v1170 = vrot.slane %v43, %v1169
    %v1171 = vadd.f32 %v1165, %v1170
    %v1172 = vadd.f32 %v1166, %v1170
    %s1173 = scalar_lea.vmem %s2, 32
    %v1174 = vld [vmem:[%s1173] sm:$0xff]
    %v1175 = vld [vmem:[%s1173 + $0x8] sm:$0xff]
    %v1176 = vld [vmem:[%s1173 + $0x10] sm:$0xff]
    %v1177 = vld [vmem:[%s1173 + $0x18] sm:$0xff]
    %v1178 = vlaneseq
    %v1179 = vshrl.u32 %v1178, 7
    %v1180 = vsub.s32 0, %v1179
    %v1181 = vrot.slane %v44, %v1180
    %v1183 = vsel %vm62, %v1171, 0
    %v1186 = vsel %vm62, %v1172, 0
    %1188 = vmatprep.subr.mxu0 0.0
    %1189 = vmatpush1.msra.mxu0 %v1174
    %1190 = vmatprep.subr.mxu0 0.0
    %1191 = vmatpush1.msra.mxu0 %v1175
    %1192 = vmatprep.subr.mxu0 0.0
    %1193 = vmatpush1.msra.mxu0 %v1176
    %1194 = vmatprep.subr.mxu0 0.0
    %1195 = vmatpush1.msra.mxu0 %v1177
    %1196 = vmatprep.subr.mxu0 0.0
    %1197 = vmatpush1.msra.mxu0 0.0
    %1198 = vmatprep.subr.mxu0 0.0
    %1199 = vmatpush1.msra.mxu0 0.0
    %1200 = vmatprep.subr.mxu0 0.0
    %1201 = vmatpush1.msra.mxu0 0.0
    %1202 = vmatprep.subr.mxu0 0.0
    %1203 = vmatpush1.msra.mxu0 0.0
    %1204 = vmatprep.subr.mxu0 0.0
    %1205 = vmatpush1.msra.mxu0 0.0
    %1206 = vmatprep.subr.mxu0 0.0
    %1207 = vmatpush1.msra.mxu0 0.0
    %1208 = vmatprep.subr.mxu0 0.0
    %1209 = vmatpush1.msra.mxu0 0.0
    %1210 = vmatprep.subr.mxu0 0.0
    %1211 = vmatpush1.msra.mxu0 0.0
    %1212 = vmatprep.subr.mxu0 0.0
    %1213 = vmatpush1.msra.mxu0 0.0
    %1214 = vmatprep.subr.mxu0 0.0
    %1215 = vmatpush1.msra.mxu0 0.0
    %1216 = vmatprep.subr.mxu0 0.0
    %1217 = vmatpush1.msra.mxu0 0.0
    %1218 = vmatprep.subr.mxu0 0.0
    %1219 = vmatpush1.msra.mxu0 0.0
    %1220 = vmatprep.subr.mxu0 0.0
    %1221 = vmatpush1.msra.mxu0 0.0
    %1222 = vmatprep.subr.mxu0 0.0
    %1223 = vmatpush1.msra.mxu0 0.0
    %1224 = vmatprep.subr.mxu0 0.0
    %1225 = vmatpush1.msra.mxu0 0.0
    %1226 = vmatprep.subr.mxu0 0.0
    %1227 = vmatpush1.msra.mxu0 0.0
    %1228 = vmatprep.subr.mxu0 0.0
    %1229 = vmatpush1.msra.mxu0 0.0
    %1230 = vmatprep.subr.mxu0 0.0
    %1231 = vmatpush1.msra.mxu0 0.0
    %1232 = vmatprep.subr.mxu0 0.0
    %1233 = vmatpush1.msra.mxu0 0.0
    %1234 = vmatprep.subr.mxu0 0.0
    %1235 = vmatpush1.msra.mxu0 0.0
    %1236 = vmatprep.subr.mxu0 0.0
    %1237 = vmatpush1.msra.mxu0 0.0
    %1238 = vmatprep.subr.mxu0 0.0
    %1239 = vmatpush1.msra.mxu0 0.0
    %1240 = vmatprep.subr.mxu0 0.0
    %1241 = vmatpush1.msra.mxu0 0.0
    %1242 = vmatprep.subr.mxu0 0.0
    %1243 = vmatpush1.msra.mxu0 0.0
    %1244 = vmatprep.subr.mxu0 0.0
    %1245 = vmatpush1.msra.mxu0 0.0
    %1246 = vmatprep.subr.mxu0 0.0
    %1247 = vmatpush1.msra.mxu0 0.0
    %1248 = vmatprep.subr.mxu0 0.0
    %1249 = vmatpush1.msra.mxu0 0.0
    %1250 = vmatprep.subr.mxu0 0.0
    %1251 = vmatpush1.msra.mxu0 0.0
    %1252 = vmatprep.mubr.f32.mxu0 0.0
    %1253 = vmatmul.mubr.f32.gmra.mrb[0].mxu0 %v1183
    %v1254 = vpop.f32.mrb[0].mxu0
    %v1255 = vadd.f32 %v1181, %v1254
    %v1256 = vpop.f32.mrb[0].mxu0
    %1257 = vmatprep.mubr.f32.mxu0 0.0
    %1258 = vmatmul.mubr.f32.gmra.mrb[0].mxu0 %v1186
    %v1259 = vpop.f32.mrb[0].mxu0
    %v1260 = vadd.f32 %v1181, %v1259
    %v1261 = vpop.f32.mrb[0].mxu0
    %1262 = vdwg.mxu0
    %v1263 = vmul.f32 %v1255, 0.25
    %v1264 = vmul.f32 %v1260, 0.25
    %1266 = vrot.lane.b32.xlu0 %v1255, 96
    %v1267 = vpop.permute.xlu0 %1266
    %v1269 = vsel %vm149, %v1263, 0
    %v1271 = vsel %vm149, %v1267, 0
    %1273 = vmatprep.subr.mxu0 0.0
    %1274 = vmatpush1.xpose.msra.mxu0 %v1271
    %1275 = vmatprep.subr.mxu0 0.0
    %1276 = vmatpush1.xpose.msra.mxu0 0.0
    %1277 = vmatprep.subr.mxu0 0.0
    %1278 = vmatpush1.xpose.msra.mxu0 0.0
    %1279 = vmatprep.subr.mxu0 0.0
    %1280 = vmatpush1.xpose.msra.mxu0 0.0
    %1281 = vmatprep.subr.mxu0 0.0
    %1282 = vmatpush1.xpose.msra.mxu0 0.0
    %1283 = vmatprep.subr.mxu0 0.0
    %1284 = vmatpush1.xpose.msra.mxu0 0.0
    %1285 = vmatprep.subr.mxu0 0.0
    %1286 = vmatpush1.xpose.msra.mxu0 0.0
    %1287 = vmatprep.subr.mxu0 0.0
    %1288 = vmatpush1.xpose.msra.mxu0 0.0
    %1289 = vmatprep.subr.mxu0 0.0
    %1290 = vmatpush1.xpose.msra.mxu0 0.0
    %1291 = vmatprep.subr.mxu0 0.0
    %1292 = vmatpush1.xpose.msra.mxu0 0.0
    %1293 = vmatprep.subr.mxu0 0.0
    %1294 = vmatpush1.xpose.msra.mxu0 0.0
    %1295 = vmatprep.subr.mxu0 0.0
    %1296 = vmatpush1.xpose.msra.mxu0 0.0
    %1297 = vmatprep.subr.mxu0 0.0
    %1298 = vmatpush1.xpose.msra.mxu0 0.0
    %1299 = vmatprep.subr.mxu0 0.0
    %1300 = vmatpush1.xpose.msra.mxu0 0.0
    %1301 = vmatprep.subr.mxu0 0.0
    %1302 = vmatpush1.xpose.msra.mxu0 0.0
    %1303 = vmatprep.subr.mxu0 0.0
    %1304 = vmatpush1.xpose.msra.mxu0 0.0
    %1305 = vmatprep.subr.mxu0 0.0
    %1306 = vmatpush1.xpose.msra.mxu0 0.0
    %1307 = vmatprep.subr.mxu0 0.0
    %1308 = vmatpush1.xpose.msra.mxu0 0.0
    %1309 = vmatprep.subr.mxu0 0.0
    %1310 = vmatpush1.xpose.msra.mxu0 0.0
    %1311 = vmatprep.subr.mxu0 0.0
    %1312 = vmatpush1.xpose.msra.mxu0 0.0
    %1313 = vmatprep.subr.mxu0 0.0
    %1314 = vmatpush1.xpose.msra.mxu0 0.0
    %1315 = vmatprep.subr.mxu0 0.0
    %1316 = vmatpush1.xpose.msra.mxu0 0.0
    %1317 = vmatprep.subr.mxu0 0.0
    %1318 = vmatpush1.xpose.msra.mxu0 0.0
    %1319 = vmatprep.subr.mxu0 0.0
    %1320 = vmatpush1.xpose.msra.mxu0 0.0
    %1321 = vmatprep.subr.mxu0 0.0
    %1322 = vmatpush1.xpose.msra.mxu0 0.0
    %1323 = vmatprep.subr.mxu0 0.0
    %1324 = vmatpush1.xpose.msra.mxu0 0.0
    %1325 = vmatprep.subr.mxu0 0.0
    %1326 = vmatpush1.xpose.msra.mxu0 0.0
    %1327 = vmatprep.subr.mxu0 0.0
    %1328 = vmatpush1.xpose.msra.mxu0 0.0
    %1329 = vmatprep.subr.mxu0 0.0
    %1330 = vmatpush1.xpose.msra.mxu0 0.0
    %1331 = vmatprep.subr.mxu0 0.0
    %1332 = vmatpush1.xpose.msra.mxu0 0.0
    %1333 = vmatprep.subr.mxu0 0.0
    %1334 = vmatpush1.xpose.msra.mxu0 0.0
    %1335 = vmatprep.subr.mxu0 0.0
    %1336 = vmatpush1.xpose.msra.mxu0 0.0
    %1337 = vmatprep.mubr.f32.mxu0 0.0
    %1338 = vmatmul.mubr.f32.gmra.mrb[0].mxu0 %v1269
    %v1339 = vpop.f32.mrb[0].mxu0
    %v1340 = vadd.f32 %v49, %v1339
    %v1341 = vpop.f32.mrb[0].mxu0
    %1342 = vdwg.mxu0
    %v1343 = vsel %vm225, %v1340, -inf
    %1344 = vmax.xlane.f32.xlu0 %v1343
    %v1345 = vpop.xlane.xlu0 %1344
    %v1346 = vsub.f32 %v1340, %v1345
    %v1347 = vmul.f32 %v1346, 1.442695
    %v1348 = vpow.pop %v1347
    %v1349 = vsel %vm225, %v1348, 0.0
    %1350 = vadd.xlane.f32.xlu0 %v1349
    %v1351 = vpop.xlane.xlu0 %1350
    %v1352 = vrcp.pop %v1351
    %v1353 = vmul.f32 %v1348, %v1352
    %1354 = vrot.lane.b32.xlu0 %v1255, 64
    %v1355 = vpop.permute.xlu0 %1354
    %v1358 = vsel %vm225, %v1353, 0
    %1360 = vmatprep.subr.mxu0 0.0
    %1361 = vmatpush1.msra.mxu0 %v1355
    %1362 = vmatprep.subr.mxu0 0.0
    %1363 = vmatpush1.msra.mxu0 0.0
    %1364 = vmatprep.subr.mxu0 0.0
    %1365 = vmatpush1.msra.mxu0 0.0
    %1366 = vmatprep.subr.mxu0 0.0
    %1367 = vmatpush1.msra.mxu0 0.0
    %1368 = vmatprep.subr.mxu0 0.0
    %1369 = vmatpush1.msra.mxu0 0.0
    %1370 = vmatprep.subr.mxu0 0.0
    %1371 = vmatpush1.msra.mxu0 0.0
    %1372 = vmatprep.subr.mxu0 0.0
    %1373 = vmatpush1.msra.mxu0 0.0
    %1374 = vmatprep.subr.mxu0 0.0
    %1375 = vmatpush1.msra.mxu0 0.0
    %1376 = vmatprep.subr.mxu0 0.0
    %1377 = vmatpush1.msra.mxu0 0.0
    %1378 = vmatprep.subr.mxu0 0.0
    %1379 = vmatpush1.msra.mxu0 0.0
    %1380 = vmatprep.subr.mxu0 0.0
    %1381 = vmatpush1.msra.mxu0 0.0
    %1382 = vmatprep.subr.mxu0 0.0
    %1383 = vmatpush1.msra.mxu0 0.0
    %1384 = vmatprep.subr.mxu0 0.0
    %1385 = vmatpush1.msra.mxu0 0.0
    %1386 = vmatprep.subr.mxu0 0.0
    %1387 = vmatpush1.msra.mxu0 0.0
    %1388 = vmatprep.subr.mxu0 0.0
    %1389 = vmatpush1.msra.mxu0 0.0
    %1390 = vmatprep.subr.mxu0 0.0
    %1391 = vmatpush1.msra.mxu0 0.0
    %1392 = vmatprep.subr.mxu0 0.0
    %1393 = vmatpush1.msra.mxu0 0.0
    %1394 = vmatprep.subr.mxu0 0.0
    %1395 = vmatpush1.msra.mxu0 0.0
    %1396 = vmatprep.subr.mxu0 0.0
    %1397 = vmatpush1.msra.mxu0 0.0
    %1398 = vmatprep.subr.mxu0 0.0
    %1399 = vmatpush1.msra.mxu0 0.0
    %1400 = vmatprep.subr.mxu0 0.0
    %1401 = vmatpush1.msra.mxu0 0.0
    %1402 = vmatprep.subr.mxu0 0.0
    %1403 = vmatpush1.msra.mxu0 0.0
    %1404 = vmatprep.subr.mxu0 0.0
    %1405 = vmatpush1.msra.mxu0 0.0
    %1406 = vmatprep.subr.mxu0 0.0
    %1407 = vmatpush1.msra.mxu0 0.0
    %1408 = vmatprep.subr.mxu0 0.0
    %1409 = vmatpush1.msra.mxu0 0.0
    %1410 = vmatprep.subr.mxu0 0.0
    %1411 = vmatpush1.msra.mxu0 0.0
    %1412 = vmatprep.subr.mxu0 0.0
    %1413 = vmatpush1.msra.mxu0 0.0
    %1414 = vmatprep.subr.mxu0 0.0
    %1415 = vmatpush1.msra.mxu0 0.0
    %1416 = vmatprep.subr.mxu0 0.0
    %1417 = vmatpush1.msra.mxu0 0.0
    %1418 = vmatprep.subr.mxu0 0.0
    %1419 = vmatpush1.msra.mxu0 0.0
    %1420 = vmatprep.subr.mxu0 0.0
    %1421 = vmatpush1.msra.mxu0 0.0
    %1422 = vmatprep.subr.mxu0 0.0
    %1423 = vmatpush1.msra.mxu0 0.0
    %1424 = vmatprep.mubr.f32.mxu0 0.0
    %1425 = vmatmul.mubr.f32.gmra.mrb[0].mxu0 %v1358
    %v1426 = vpop.f32.mrb[0].mxu0
    %v1427 = vadd.f32 0.0, %v1426
    %v1428 = vpop.f32.mrb[0].mxu0
    %1429 = vdwg.mxu0
    %1431 = vrot.lane.b32.xlu0 %v1260, 96
    %v1432 = vpop.permute.xlu0 %1431
    %v1434 = vsel %vm149, %v1264, 0
    %v1436 = vsel %vm149, %v1432, 0
    %1438 = vmatprep.subr.mxu0 0.0
    %1439 = vmatpush1.xpose.msra.mxu0 %v1436
    %1440 = vmatprep.subr.mxu0 0.0
    %1441 = vmatpush1.xpose.msra.mxu0 0.0
    %1442 = vmatprep.subr.mxu0 0.0
    %1443 = vmatpush1.xpose.msra.mxu0 0.0
    %1444 = vmatprep.subr.mxu0 0.0
    %1445 = vmatpush1.xpose.msra.mxu0 0.0
    %1446 = vmatprep.subr.mxu0 0.0
    %1447 = vmatpush1.xpose.msra.mxu0 0.0
    %1448 = vmatprep.subr.mxu0 0.0
    %1449 = vmatpush1.xpose.msra.mxu0 0.0
    %1450 = vmatprep.subr.mxu0 0.0
    %1451 = vmatpush1.xpose.msra.mxu0 0.0
    %1452 = vmatprep.subr.mxu0 0.0
    %1453 = vmatpush1.xpose.msra.mxu0 0.0
    %1454 = vmatprep.subr.mxu0 0.0
    %1455 = vmatpush1.xpose.msra.mxu0 0.0
    %1456 = vmatprep.subr.mxu0 0.0
    %1457 = vmatpush1.xpose.msra.mxu0 0.0
    %1458 = vmatprep.subr.mxu0 0.0
    %1459 = vmatpush1.xpose.msra.mxu0 0.0
    %1460 = vmatprep.subr.mxu0 0.0
    %1461 = vmatpush1.xpose.msra.mxu0 0.0
    %1462 = vmatprep.subr.mxu0 0.0
    %1463 = vmatpush1.xpose.msra.mxu0 0.0
    %1464 = vmatprep.subr.mxu0 0.0
    %1465 = vmatpush1.xpose.msra.mxu0 0.0
    %1466 = vmatprep.subr.mxu0 0.0
    %1467 = vmatpush1.xpose.msra.mxu0 0.0
    %1468 = vmatprep.subr.mxu0 0.0
    %1469 = vmatpush1.xpose.msra.mxu0 0.0
    %1470 = vmatprep.subr.mxu0 0.0
    %1471 = vmatpush1.xpose.msra.mxu0 0.0
    %1472 = vmatprep.subr.mxu0 0.0
    %1473 = vmatpush1.xpose.msra.mxu0 0.0
    %1474 = vmatprep.subr.mxu0 0.0
    %1475 = vmatpush1.xpose.msra.mxu0 0.0
    %1476 = vmatprep.subr.mxu0 0.0
    %1477 = vmatpush1.xpose.msra.mxu0 0.0
    %1478 = vmatprep.subr.mxu0 0.0
    %1479 = vmatpush1.xpose.msra.mxu0 0.0
    %1480 = vmatprep.subr.mxu0 0.0
    %1481 = vmatpush1.xpose.msra.mxu0 0.0
    %1482 = vmatprep.subr.mxu0 0.0
    %1483 = vmatpush1.xpose.msra.mxu0 0.0
    %1484 = vmatprep.subr.mxu0 0.0
    %1485 = vmatpush1.xpose.msra.mxu0 0.0
    %1486 = vmatprep.subr.mxu0 0.0
    %1487 = vmatpush1.xpose.msra.mxu0 0.0
    %1488 = vmatprep.subr.mxu0 0.0
    %1489 = vmatpush1.xpose.msra.mxu0 0.0
    %1490 = vmatprep.subr.mxu0 0.0
    %1491 = vmatpush1.xpose.msra.mxu0 0.0
    %1492 = vmatprep.subr.mxu0 0.0
    %1493 = vmatpush1.xpose.msra.mxu0 0.0
    %1494 = vmatprep.subr.mxu0 0.0
    %1495 = vmatpush1.xpose.msra.mxu0 0.0
    %1496 = vmatprep.subr.mxu0 0.0
    %1497 = vmatpush1.xpose.msra.mxu0 0.0
    %1498 = vmatprep.subr.mxu0 0.0
    %1499 = vmatpush1.xpose.msra.mxu0 0.0
    %1500 = vmatprep.subr.mxu0 0.0
    %1501 = vmatpush1.xpose.msra.mxu0 0.0
    %1502 = vmatprep.mubr.f32.mxu0 0.0
    %1503 = vmatmul.mubr.f32.gmra.mrb[0].mxu0 %v1434
    %v1504 = vpop.f32.mrb[0].mxu0
    %v1505 = vadd.f32 %v53, %v1504
    %v1506 = vpop.f32.mrb[0].mxu0
    %1507 = vdwg.mxu0
    %v1508 = vsel %vm225, %v1505, -inf
    %1509 = vmax.xlane.f32.xlu0 %v1508
    %v1510 = vpop.xlane.xlu0 %1509
    %v1511 = vsub.f32 %v1505, %v1510
    %v1512 = vmul.f32 %v1511, 1.442695
    %v1513 = vpow.pop %v1512
    %v1514 = vsel %vm225, %v1513, 0.0
    %1515 = vadd.xlane.f32.xlu0 %v1514
    %v1516 = vpop.xlane.xlu0 %1515
    %v1517 = vrcp.pop %v1516
    %v1518 = vmul.f32 %v1513, %v1517
    %1519 = vrot.lane.b32.xlu0 %v1260, 64
    %v1520 = vpop.permute.xlu0 %1519
    %v1523 = vsel %vm225, %v1518, 0
    %1525 = vmatprep.subr.mxu0 0.0
    %1526 = vmatpush1.msra.mxu0 %v1520
    %1527 = vmatprep.subr.mxu0 0.0
    %1528 = vmatpush1.msra.mxu0 0.0
    %1529 = vmatprep.subr.mxu0 0.0
    %1530 = vmatpush1.msra.mxu0 0.0
    %1531 = vmatprep.subr.mxu0 0.0
    %1532 = vmatpush1.msra.mxu0 0.0
    %1533 = vmatprep.subr.mxu0 0.0
    %1534 = vmatpush1.msra.mxu0 0.0
    %1535 = vmatprep.subr.mxu0 0.0
    %1536 = vmatpush1.msra.mxu0 0.0
    %1537 = vmatprep.subr.mxu0 0.0
    %1538 = vmatpush1.msra.mxu0 0.0
    %1539 = vmatprep.subr.mxu0 0.0
    %1540 = vmatpush1.msra.mxu0 0.0
    %1541 = vmatprep.subr.mxu0 0.0
    %1542 = vmatpush1.msra.mxu0 0.0
    %1543 = vmatprep.subr.mxu0 0.0
    %1544 = vmatpush1.msra.mxu0 0.0
    %1545 = vmatprep.subr.mxu0 0.0
    %1546 = vmatpush1.msra.mxu0 0.0
    %1547 = vmatprep.subr.mxu0 0.0
    %1548 = vmatpush1.msra.mxu0 0.0
    %1549 = vmatprep.subr.mxu0 0.0
    %1550 = vmatpush1.msra.mxu0 0.0
    %1551 = vmatprep.subr.mxu0 0.0
    %1552 = vmatpush1.msra.mxu0 0.0
    %1553 = vmatprep.subr.mxu0 0.0
    %1554 = vmatpush1.msra.mxu0 0.0
    %1555 = vmatprep.subr.mxu0 0.0
    %1556 = vmatpush1.msra.mxu0 0.0
    %1557 = vmatprep.subr.mxu0 0.0
    %1558 = vmatpush1.msra.mxu0 0.0
    %1559 = vmatprep.subr.mxu0 0.0
    %1560 = vmatpush1.msra.mxu0 0.0
    %1561 = vmatprep.subr.mxu0 0.0
    %1562 = vmatpush1.msra.mxu0 0.0
    %1563 = vmatprep.subr.mxu0 0.0
    %1564 = vmatpush1.msra.mxu0 0.0
    %1565 = vmatprep.subr.mxu0 0.0
    %1566 = vmatpush1.msra.mxu0 0.0
    %1567 = vmatprep.subr.mxu0 0.0
    %1568 = vmatpush1.msra.mxu0 0.0
    %1569 = vmatprep.subr.mxu0 0.0
    %1570 = vmatpush1.msra.mxu0 0.0
    %1571 = vmatprep.subr.mxu0 0.0
    %1572 = vmatpush1.msra.mxu0 0.0
    %1573 = vmatprep.subr.mxu0 0.0
    %1574 = vmatpush1.msra.mxu0 0.0
    %1575 = vmatprep.subr.mxu0 0.0
    %1576 = vmatpush1.msra.mxu0 0.0
    %1577 = vmatprep.subr.mxu0 0.0
    %1578 = vmatpush1.msra.mxu0 0.0
    %1579 = vmatprep.subr.mxu0 0.0
    %1580 = vmatpush1.msra.mxu0 0.0
    %1581 = vmatprep.subr.mxu0 0.0
    %1582 = vmatpush1.msra.mxu0 0.0
    %1583 = vmatprep.subr.mxu0 0.0
    %1584 = vmatpush1.msra.mxu0 0.0
    %1585 = vmatprep.subr.mxu0 0.0
    %1586 = vmatpush1.msra.mxu0 0.0
    %1587 = vmatprep.subr.mxu0 0.0
    %1588 = vmatpush1.msra.mxu0 0.0
    %1589 = vmatprep.mubr.f32.mxu0 0.0
    %1590 = vmatmul.mubr.f32.gmra.mrb[0].mxu0 %v1523
    %v1591 = vpop.f32.mrb[0].mxu0
    %v1592 = vadd.f32 0.0, %v1591
    %v1593 = vpop.f32.mrb[0].mxu0
    %1594 = vdwg.mxu0
    %1595 = vrot.lane.b32.xlu0 %v1263, 112
    %v1596 = vpop.permute.xlu0 %1595
    %1597 = vrot.lane.b32.xlu0 %v1255, 80
    %v1598 = vpop.permute.xlu0 %1597
    %v1599 = vsel %vm149, %v1596, 0
    %v1601 = vsel %vm149, %v1598, 0
    %1603 = vmatprep.subr.mxu0 0.0
    %1604 = vmatpush1.xpose.msra.mxu0 %v1601
    %1605 = vmatprep.subr.mxu0 0.0
    %1606 = vmatpush1.xpose.msra.mxu0 0.0
    %1607 = vmatprep.subr.mxu0 0.0
    %1608 = vmatpush1.xpose.msra.mxu0 0.0
    %1609 = vmatprep.subr.mxu0 0.0
    %1610 = vmatpush1.xpose.msra.mxu0 0.0
    %1611 = vmatprep.subr.mxu0 0.0
    %1612 = vmatpush1.xpose.msra.mxu0 0.0
    %1613 = vmatprep.subr.mxu0 0.0
    %1614 = vmatpush1.xpose.msra.mxu0 0.0
    %1615 = vmatprep.subr.mxu0 0.0
    %1616 = vmatpush1.xpose.msra.mxu0 0.0
    %1617 = vmatprep.subr.mxu0 0.0
    %1618 = vmatpush1.xpose.msra.mxu0 0.0
    %1619 = vmatprep.subr.mxu0 0.0
    %1620 = vmatpush1.xpose.msra.mxu0 0.0
    %1621 = vmatprep.subr.mxu0 0.0
    %1622 = vmatpush1.xpose.msra.mxu0 0.0
    %1623 = vmatprep.subr.mxu0 0.0
    %1624 = vmatpush1.xpose.msra.mxu0 0.0
    %1625 = vmatprep.subr.mxu0 0.0
    %1626 = vmatpush1.xpose.msra.mxu0 0.0
    %1627 = vmatprep.subr.mxu0 0.0
    %1628 = vmatpush1.xpose.msra.mxu0 0.0
    %1629 = vmatprep.subr.mxu0 0.0
    %1630 = vmatpush1.xpose.msra.mxu0 0.0
    %1631 = vmatprep.subr.mxu0 0.0
    %1632 = vmatpush1.xpose.msra.mxu0 0.0
    %1633 = vmatprep.subr.mxu0 0.0
    %1634 = vmatpush1.xpose.msra.mxu0 0.0
    %1635 = vmatprep.subr.mxu0 0.0
    %1636 = vmatpush1.xpose.msra.mxu0 0.0
    %1637 = vmatprep.subr.mxu0 0.0
    %1638 = vmatpush1.xpose.msra.mxu0 0.0
    %1639 = vmatprep.subr.mxu0 0.0
    %1640 = vmatpush1.xpose.msra.mxu0 0.0
    %1641 = vmatprep.subr.mxu0 0.0
    %1642 = vmatpush1.xpose.msra.mxu0 0.0
    %1643 = vmatprep.subr.mxu0 0.0
    %1644 = vmatpush1.xpose.msra.mxu0 0.0
    %1645 = vmatprep.subr.mxu0 0.0
    %1646 = vmatpush1.xpose.msra.mxu0 0.0
    %1647 = vmatprep.subr.mxu0 0.0
    %1648 = vmatpush1.xpose.msra.mxu0 0.0
    %1649 = vmatprep.subr.mxu0 0.0
    %1650 = vmatpush1.xpose.msra.mxu0 0.0
    %1651 = vmatprep.subr.mxu0 0.0
    %1652 = vmatpush1.xpose.msra.mxu0 0.0
    %1653 = vmatprep.subr.mxu0 0.0
    %1654 = vmatpush1.xpose.msra.mxu0 0.0
    %1655 = vmatprep.subr.mxu0 0.0
    %1656 = vmatpush1.xpose.msra.mxu0 0.0
    %1657 = vmatprep.subr.mxu0 0.0
    %1658 = vmatpush1.xpose.msra.mxu0 0.0
    %1659 = vmatprep.subr.mxu0 0.0
    %1660 = vmatpush1.xpose.msra.mxu0 0.0
    %1661 = vmatprep.subr.mxu0 0.0
    %1662 = vmatpush1.xpose.msra.mxu0 0.0
    %1663 = vmatprep.subr.mxu0 0.0
    %1664 = vmatpush1.xpose.msra.mxu0 0.0
    %1665 = vmatprep.subr.mxu0 0.0
    %1666 = vmatpush1.xpose.msra.mxu0 0.0
    %1667 = vmatprep.mubr.f32.mxu0 0.0
    %1668 = vmatmul.mubr.f32.gmra.mrb[0].mxu0 %v1599
    %v1669 = vpop.f32.mrb[0].mxu0
    %v1670 = vadd.f32 %v49, %v1669
    %v1671 = vpop.f32.mrb[0].mxu0
    %1672 = vdwg.mxu0
    %v1673 = vsel %vm225, %v1670, -inf
    %1674 = vmax.xlane.f32.xlu0 %v1673
    %v1675 = vpop.xlane.xlu0 %1674
    %v1676 = vsub.f32 %v1670, %v1675
    %v1677 = vmul.f32 %v1676, 1.442695
    %v1678 = vpow.pop %v1677
    %v1679 = vsel %vm225, %v1678, 0.0
    %1680 = vadd.xlane.f32.xlu0 %v1679
    %v1681 = vpop.xlane.xlu0 %1680
    %v1682 = vrcp.pop %v1681
    %v1683 = vmul.f32 %v1678, %v1682
    %1684 = vrot.lane.b32.xlu0 %v1255, 48
    %v1685 = vpop.permute.xlu0 %1684
    %v1688 = vsel %vm225, %v1683, 0
    %1690 = vmatprep.subr.mxu0 0.0
    %1691 = vmatpush1.msra.mxu0 %v1685
    %1692 = vmatprep.subr.mxu0 0.0
    %1693 = vmatpush1.msra.mxu0 0.0
    %1694 = vmatprep.subr.mxu0 0.0
    %1695 = vmatpush1.msra.mxu0 0.0
    %1696 = vmatprep.subr.mxu0 0.0
    %1697 = vmatpush1.msra.mxu0 0.0
    %1698 = vmatprep.subr.mxu0 0.0
    %1699 = vmatpush1.msra.mxu0 0.0
    %1700 = vmatprep.subr.mxu0 0.0
    %1701 = vmatpush1.msra.mxu0 0.0
    %1702 = vmatprep.subr.mxu0 0.0
    %1703 = vmatpush1.msra.mxu0 0.0
    %1704 = vmatprep.subr.mxu0 0.0
    %1705 = vmatpush1.msra.mxu0 0.0
    %1706 = vmatprep.subr.mxu0 0.0
    %1707 = vmatpush1.msra.mxu0 0.0
    %1708 = vmatprep.subr.mxu0 0.0
    %1709 = vmatpush1.msra.mxu0 0.0
    %1710 = vmatprep.subr.mxu0 0.0
    %1711 = vmatpush1.msra.mxu0 0.0
    %1712 = vmatprep.subr.mxu0 0.0
    %1713 = vmatpush1.msra.mxu0 0.0
    %1714 = vmatprep.subr.mxu0 0.0
    %1715 = vmatpush1.msra.mxu0 0.0
    %1716 = vmatprep.subr.mxu0 0.0
    %1717 = vmatpush1.msra.mxu0 0.0
    %1718 = vmatprep.subr.mxu0 0.0
    %1719 = vmatpush1.msra.mxu0 0.0
    %1720 = vmatprep.subr.mxu0 0.0
    %1721 = vmatpush1.msra.mxu0 0.0
    %1722 = vmatprep.subr.mxu0 0.0
    %1723 = vmatpush1.msra.mxu0 0.0
    %1724 = vmatprep.subr.mxu0 0.0
    %1725 = vmatpush1.msra.mxu0 0.0
    %1726 = vmatprep.subr.mxu0 0.0
    %1727 = vmatpush1.msra.mxu0 0.0
    %1728 = vmatprep.subr.mxu0 0.0
    %1729 = vmatpush1.msra.mxu0 0.0
    %1730 = vmatprep.subr.mxu0 0.0
    %1731 = vmatpush1.msra.mxu0 0.0
    %1732 = vmatprep.subr.mxu0 0.0
    %1733 = vmatpush1.msra.mxu0 0.0
    %1734 = vmatprep.subr.mxu0 0.0
    %1735 = vmatpush1.msra.mxu0 0.0
    %1736 = vmatprep.subr.mxu0 0.0
    %1737 = vmatpush1.msra.mxu0 0.0
    %1738 = vmatprep.subr.mxu0 0.0
    %1739 = vmatpush1.msra.mxu0 0.0
    %1740 = vmatprep.subr.mxu0 0.0
    %1741 = vmatpush1.msra.mxu0 0.0
    %1742 = vmatprep.subr.mxu0 0.0
    %1743 = vmatpush1.msra.mxu0 0.0
    %1744 = vmatprep.subr.mxu0 0.0
    %1745 = vmatpush1.msra.mxu0 0.0
    %1746 = vmatprep.subr.mxu0 0.0
    %1747 = vmatpush1.msra.mxu0 0.0
    %1748 = vmatprep.subr.mxu0 0.0
    %1749 = vmatpush1.msra.mxu0 0.0
    %1750 = vmatprep.subr.mxu0 0.0
    %1751 = vmatpush1.msra.mxu0 0.0
    %1752 = vmatprep.subr.mxu0 0.0
    %1753 = vmatpush1.msra.mxu0 0.0
    %1754 = vmatprep.mubr.f32.mxu0 0.0
    %1755 = vmatmul.mubr.f32.gmra.mrb[0].mxu0 %v1688
    %v1756 = vpop.f32.mrb[0].mxu0
    %v1757 = vadd.f32 0.0, %v1756
    %v1758 = vpop.f32.mrb[0].mxu0
    %1759 = vdwg.mxu0
    %1760 = vrot.lane.b32.xlu0 %v1264, 112
    %v1761 = vpop.permute.xlu0 %1760
    %1762 = vrot.lane.b32.xlu0 %v1260, 80
    %v1763 = vpop.permute.xlu0 %1762
    %v1764 = vsel %vm149, %v1761, 0
    %v1766 = vsel %vm149, %v1763, 0
    %1768 = vmatprep.subr.mxu0 0.0
    %1769 = vmatpush1.xpose.msra.mxu0 %v1766
    %1770 = vmatprep.subr.mxu0 0.0
    %1771 = vmatpush1.xpose.msra.mxu0 0.0
    %1772 = vmatprep.subr.mxu0 0.0
    %1773 = vmatpush1.xpose.msra.mxu0 0.0
    %1774 = vmatprep.subr.mxu0 0.0
    %1775 = vmatpush1.xpose.msra.mxu0 0.0
    %1776 = vmatprep.subr.mxu0 0.0
    %1777 = vmatpush1.xpose.msra.mxu0 0.0
    %1778 = vmatprep.subr.mxu0 0.0
    %1779 = vmatpush1.xpose.msra.mxu0 0.0
    %1780 = vmatprep.subr.mxu0 0.0
    %1781 = vmatpush1.xpose.msra.mxu0 0.0
    %1782 = vmatprep.subr.mxu0 0.0
    %1783 = vmatpush1.xpose.msra.mxu0 0.0
    %1784 = vmatprep.subr.mxu0 0.0
    %1785 = vmatpush1.xpose.msra.mxu0 0.0
    %1786 = vmatprep.subr.mxu0 0.0
    %1787 = vmatpush1.xpose.msra.mxu0 0.0
    %1788 = vmatprep.subr.mxu0 0.0
    %1789 = vmatpush1.xpose.msra.mxu0 0.0
    %1790 = vmatprep.subr.mxu0 0.0
    %1791 = vmatpush1.xpose.msra.mxu0 0.0
    %1792 = vmatprep.subr.mxu0 0.0
    %1793 = vmatpush1.xpose.msra.mxu0 0.0
    %1794 = vmatprep.subr.mxu0 0.0
    %1795 = vmatpush1.xpose.msra.mxu0 0.0
    %1796 = vmatprep.subr.mxu0 0.0
    %1797 = vmatpush1.xpose.msra.mxu0 0.0
    %1798 = vmatprep.subr.mxu0 0.0
    %1799 = vmatpush1.xpose.msra.mxu0 0.0
    %1800 = vmatprep.subr.mxu0 0.0
    %1801 = vmatpush1.xpose.msra.mxu0 0.0
    %1802 = vmatprep.subr.mxu0 0.0
    %1803 = vmatpush1.xpose.msra.mxu0 0.0
    %1804 = vmatprep.subr.mxu0 0.0
    %1805 = vmatpush1.xpose.msra.mxu0 0.0
    %1806 = vmatprep.subr.mxu0 0.0
    %1807 = vmatpush1.xpose.msra.mxu0 0.0
    %1808 = vmatprep.subr.mxu0 0.0
    %1809 = vmatpush1.xpose.msra.mxu0 0.0
    %1810 = vmatprep.subr.mxu0 0.0
    %1811 = vmatpush1.xpose.msra.mxu0 0.0
    %1812 = vmatprep.subr.mxu0 0.0
    %1813 = vmatpush1.xpose.msra.mxu0 0.0
    %1814 = vmatprep.subr.mxu0 0.0
    %1815 = vmatpush1.xpose.msra.mxu0 0.0
    %1816 = vmatprep.subr.mxu0 0.0
    %1817 = vmatpush1.xpose.msra.mxu0 0.0
    %1818 = vmatprep.subr.mxu0 0.0
    %1819 = vmatpush1.xpose.msra.mxu0 0.0
    %1820 = vmatprep.subr.mxu0 0.0
    %1821 = vmatpush1.xpose.msra.mxu0 0.0
    %1822 = vmatprep.subr.mxu0 0.0
    %1823 = vmatpush1.xpose.msra.mxu0 0.0
    %1824 = vmatprep.subr.mxu0 0.0
    %1825 = vmatpush1.xpose.msra.mxu0 0.0
    %1826 = vmatprep.subr.mxu0 0.0
    %1827 = vmatpush1.xpose.msra.mxu0 0.0
    %1828 = vmatprep.subr.mxu0 0.0
    %1829 = vmatpush1.xpose.msra.mxu0 0.0
    %1830 = vmatprep.subr.mxu0 0.0
    %1831 = vmatpush1.xpose.msra.mxu0 0.0
    %1832 = vmatprep.mubr.f32.mxu0 0.0
    %1833 = vmatmul.mubr.f32.gmra.mrb[0].mxu0 %v1764
    %v1834 = vpop.f32.mrb[0].mxu0
    %v1835 = vadd.f32 %v53, %v1834
    %v1836 = vpop.f32.mrb[0].mxu0
    %1837 = vdwg.mxu0
    %v1838 = vsel %vm225, %v1835, -inf
    %1839 = vmax.xlane.f32.xlu0 %v1838
    %v1840 = vpop.xlane.xlu0 %1839
    %v1841 = vsub.f32 %v1835, %v1840
    %v1842 = vmul.f32 %v1841, 1.442695
    %v1843 = vpow.pop %v1842
    %v1844 = vsel %vm225, %v1843, 0.0
    %1845 = vadd.xlane.f32.xlu0 %v1844
    %v1846 = vpop.xlane.xlu0 %1845
    %v1847 = vrcp.pop %v1846
    %v1848 = vmul.f32 %v1843, %v1847
    %1849 = vrot.lane.b32.xlu0 %v1260, 48
    %v1850 = vpop.permute.xlu0 %1849
    %v1853 = vsel %vm225, %v1848, 0
    %1855 = vmatprep.subr.mxu0 0.0
    %1856 = vmatpush1.msra.mxu0 %v1850
    %1857 = vmatprep.subr.mxu0 0.0
    %1858 = vmatpush1.msra.mxu0 0.0
    %1859 = vmatprep.subr.mxu0 0.0
    %1860 = vmatpush1.msra.mxu0 0.0
    %1861 = vmatprep.subr.mxu0 0.0
    %1862 = vmatpush1.msra.mxu0 0.0
    %1863 = vmatprep.subr.mxu0 0.0
    %1864 = vmatpush1.msra.mxu0 0.0
    %1865 = vmatprep.subr.mxu0 0.0
    %1866 = vmatpush1.msra.mxu0 0.0
    %1867 = vmatprep.subr.mxu0 0.0
    %1868 = vmatpush1.msra.mxu0 0.0
    %1869 = vmatprep.subr.mxu0 0.0
    %1870 = vmatpush1.msra.mxu0 0.0
    %1871 = vmatprep.subr.mxu0 0.0
    %1872 = vmatpush1.msra.mxu0 0.0
    %1873 = vmatprep.subr.mxu0 0.0
    %1874 = vmatpush1.msra.mxu0 0.0
    %1875 = vmatprep.subr.mxu0 0.0
    %1876 = vmatpush1.msra.mxu0 0.0
    %1877 = vmatprep.subr.mxu0 0.0
    %1878 = vmatpush1.msra.mxu0 0.0
    %1879 = vmatprep.subr.mxu0 0.0
    %1880 = vmatpush1.msra.mxu0 0.0
    %1881 = vmatprep.subr.mxu0 0.0
    %1882 = vmatpush1.msra.mxu0 0.0
    %1883 = vmatprep.subr.mxu0 0.0
    %1884 = vmatpush1.msra.mxu0 0.0
    %1885 = vmatprep.subr.mxu0 0.0
    %1886 = vmatpush1.msra.mxu0 0.0
    %1887 = vmatprep.subr.mxu0 0.0
    %1888 = vmatpush1.msra.mxu0 0.0
    %1889 = vmatprep.subr.mxu0 0.0
    %1890 = vmatpush1.msra.mxu0 0.0
    %1891 = vmatprep.subr.mxu0 0.0
    %1892 = vmatpush1.msra.mxu0 0.0
    %1893 = vmatprep.subr.mxu0 0.0
    %1894 = vmatpush1.msra.mxu0 0.0
    %1895 = vmatprep.subr.mxu0 0.0
    %1896 = vmatpush1.msra.mxu0 0.0
    %1897 = vmatprep.subr.mxu0 0.0
    %1898 = vmatpush1.msra.mxu0 0.0
    %1899 = vmatprep.subr.mxu0 0.0
    %1900 = vmatpush1.msra.mxu0 0.0
    %1901 = vmatprep.subr.mxu0 0.0
    %1902 = vmatpush1.msra.mxu0 0.0
    %1903 = vmatprep.subr.mxu0 0.0
    %1904 = vmatpush1.msra.mxu0 0.0
    %1905 = vmatprep.subr.mxu0 0.0
    %1906 = vmatpush1.msra.mxu0 0.0
    %1907 = vmatprep.subr.mxu0 0.0
    %1908 = vmatpush1.msra.mxu0 0.0
    %1909 = vmatprep.subr.mxu0 0.0
    %1910 = vmatpush1.msra.mxu0 0.0
    %1911 = vmatprep.subr.mxu0 0.0
    %1912 = vmatpush1.msra.mxu0 0.0
    %1913 = vmatprep.subr.mxu0 0.0
    %1914 = vmatpush1.msra.mxu0 0.0
    %1915 = vmatprep.subr.mxu0 0.0
    %1916 = vmatpush1.msra.mxu0 0.0
    %1917 = vmatprep.subr.mxu0 0.0
    %1918 = vmatpush1.msra.mxu0 0.0
    %1919 = vmatprep.mubr.f32.mxu0 0.0
    %1920 = vmatmul.mubr.f32.gmra.mrb[0].mxu0 %v1853
    %v1921 = vpop.f32.mrb[0].mxu0
    %v1922 = vadd.f32 0.0, %v1921
    %v1923 = vpop.f32.mrb[0].mxu0
    %1924 = vdwg.mxu0
    %1927 = vrot.lane.b32.xlu0 %v1757, 16
    %v1928 = vpop.permute.xlu0 %1927
    %1929 = vrot.lane.b32.xlu0 %v1922, 16
    %v1930 = vpop.permute.xlu0 %1929
    %v1933 = vsel %vm149, %v1427, %v1928
    %v1934 = vsel %vm149, %v1592, %v1930
    %s1935 = scalar_lea.vmem %s3, 32
    %v1936 = vld [vmem:[%s1935] sm:$0xff]
    %v1937 = vld [vmem:[%s1935 + $0x8] sm:$0xff]
    %v1938 = vld [vmem:[%s1935 + $0x10] sm:$0xff]
    %v1939 = vld [vmem:[%s1935 + $0x18] sm:$0xff]
    %v1940 = vlaneseq
    %v1941 = vshrl.u32 %v1940, 7
    %v1942 = vsub.s32 2, %v1941
    %v1943 = vrot.slane %v44, %v1942
    %v1945 = vsel %vm62, %v1933, 0
    %v1948 = vsel %vm62, %v1934, 0
    %1950 = vmatprep.subr.mxu0 0.0
    %1951 = vmatpush1.msra.mxu0 %v1936
    %1952 = vmatprep.subr.mxu0 0.0
    %1953 = vmatpush1.msra.mxu0 %v1937
    %1954 = vmatprep.subr.mxu0 0.0
    %1955 = vmatpush1.msra.mxu0 %v1938
    %1956 = vmatprep.subr.mxu0 0.0
    %1957 = vmatpush1.msra.mxu0 %v1939
    %1958 = vmatprep.subr.mxu0 0.0
    %1959 = vmatpush1.msra.mxu0 0.0
    %1960 = vmatprep.subr.mxu0 0.0
    %1961 = vmatpush1.msra.mxu0 0.0
    %1962 = vmatprep.subr.mxu0 0.0
    %1963 = vmatpush1.msra.mxu0 0.0
    %1964 = vmatprep.subr.mxu0 0.0
    %1965 = vmatpush1.msra.mxu0 0.0
    %1966 = vmatprep.subr.mxu0 0.0
    %1967 = vmatpush1.msra.mxu0 0.0
    %1968 = vmatprep.subr.mxu0 0.0
    %1969 = vmatpush1.msra.mxu0 0.0
    %1970 = vmatprep.subr.mxu0 0.0
    %1971 = vmatpush1.msra.mxu0 0.0
    %1972 = vmatprep.subr.mxu0 0.0
    %1973 = vmatpush1.msra.mxu0 0.0
    %1974 = vmatprep.subr.mxu0 0.0
    %1975 = vmatpush1.msra.mxu0 0.0
    %1976 = vmatprep.subr.mxu0 0.0
    %1977 = vmatpush1.msra.mxu0 0.0
    %1978 = vmatprep.subr.mxu0 0.0
    %1979 = vmatpush1.msra.mxu0 0.0
    %1980 = vmatprep.subr.mxu0 0.0
    %1981 = vmatpush1.msra.mxu0 0.0
    %1982 = vmatprep.subr.mxu0 0.0
    %1983 = vmatpush1.msra.mxu0 0.0
    %1984 = vmatprep.subr.mxu0 0.0
    %1985 = vmatpush1.msra.mxu0 0.0
    %1986 = vmatprep.subr.mxu0 0.0
    %1987 = vmatpush1.msra.mxu0 0.0
    %1988 = vmatprep.subr.mxu0 0.0
    %1989 = vmatpush1.msra.mxu0 0.0
    %1990 = vmatprep.subr.mxu0 0.0
    %1991 = vmatpush1.msra.mxu0 0.0
    %1992 = vmatprep.subr.mxu0 0.0
    %1993 = vmatpush1.msra.mxu0 0.0
    %1994 = vmatprep.subr.mxu0 0.0
    %1995 = vmatpush1.msra.mxu0 0.0
    %1996 = vmatprep.subr.mxu0 0.0
    %1997 = vmatpush1.msra.mxu0 0.0
    %1998 = vmatprep.subr.mxu0 0.0
    %1999 = vmatpush1.msra.mxu0 0.0
    %2000 = vmatprep.subr.mxu0 0.0
    %2001 = vmatpush1.msra.mxu0 0.0
    %2002 = vmatprep.subr.mxu0 0.0
    %2003 = vmatpush1.msra.mxu0 0.0
    %2004 = vmatprep.subr.mxu0 0.0
    %2005 = vmatpush1.msra.mxu0 0.0
    %2006 = vmatprep.subr.mxu0 0.0
    %2007 = vmatpush1.msra.mxu0 0.0
    %2008 = vmatprep.subr.mxu0 0.0
    %2009 = vmatpush1.msra.mxu0 0.0
    %2010 = vmatprep.subr.mxu0 0.0
    %2011 = vmatpush1.msra.mxu0 0.0
    %2012 = vmatprep.subr.mxu0 0.0
    %2013 = vmatpush1.msra.mxu0 0.0
    %2014 = vmatprep.mubr.f32.mxu0 0.0
    %2015 = vmatmul.mubr.f32.gmra.mrb[0].mxu0 %v1945
    %v2016 = vpop.f32.mrb[0].mxu0
    %v2017 = vadd.f32 %v1943, %v2016
    %v2018 = vpop.f32.mrb[0].mxu0
    %2019 = vmatprep.mubr.f32.mxu0 0.0
    %2020 = vmatmul.mubr.f32.gmra.mrb[0].mxu0 %v1948
    %v2021 = vpop.f32.mrb[0].mxu0
    %v2022 = vadd.f32 %v1943, %v2021
    %v2023 = vpop.f32.mrb[0].mxu0
    %2024 = vdwg.mxu0
    %v2025 = vadd.f32 %v1171, %v2017
    %v2026 = vadd.f32 %v1172, %v2022
    %v2027 = vsel %vm62, %v2025, 0.0
    %2028 = vadd.xlane.f32.xlu0 %v2027
    %v2029 = vpop.xlane.xlu0 %2028
    %v2030 = vsel %vm62, %v2026, 0.0
    %2031 = vadd.xlane.f32.xlu0 %v2030
    %v2032 = vpop.xlane.xlu0 %2031
    %v2033 = vmul.f32 %v2029, %v915
    %v2034 = vmul.f32 %v2032, %v915
    %v2035 = vsub.f32 %v2025, %v2033
    %v2036 = vsub.f32 %v2026, %v2034
    %v2037 = vmul.f32 %v2035, %v2035
    %v2038 = vmul.f32 %v2036, %v2036
    %v2039 = vsel %vm62, %v2037, 0.0
    %2040 = vadd.xlane.f32.xlu0 %v2039
    %v2041 = vpop.xlane.xlu0 %2040
    %v2042 = vsel %vm62, %v2038, 0.0
    %2043 = vadd.xlane.f32.xlu0 %v2042
    %v2044 = vpop.xlane.xlu0 %2043
    %v2045 = vmul.f32 %v2041, %v915
    %v2046 = vmul.f32 %v2044, %v915
    %v2047 = vadd.f32 %v2045, 1e-05
    %v2048 = vadd.f32 %v2046, 1e-05
    %v2049 = vrsqrt.pop %v2047
    %v2050 = vrsqrt.pop %v2048
    %v2051 = vmul.f32 %v2035, %v2049
    %v2052 = vmul.f32 %v2036, %v2050
    %v2053 = vlaneseq
    %v2054 = vshrl.u32 %v2053, 7
    %v2055 = vsub.s32 4, %v2054
    %v2056 = vrot.slane %v44, %v2055
    %v2057 = vmul.f32 %v2051, %v2056
    %v2058 = vmul.f32 %v2052, %v2056
    %v2059 = vlaneseq
    %v2060 = vshrl.u32 %v2059, 7
    %v2061 = vsub.s32 5, %v2060
    %v2062 = vrot.slane %v44, %v2061
    %v2063 = vadd.f32 %v2057, %v2062
    %v2064 = vadd.f32 %v2058, %v2062
    %s2065 = scalar_lea.vmem %s4, 32
    %v2066 = vld [vmem:[%s2065] sm:$0xff]
    %v2067 = vld [vmem:[%s2065 + $0x8] sm:$0xff]
    %v2068 = vld [vmem:[%s2065 + $0x10] sm:$0xff]
    %v2069 = vld [vmem:[%s2065 + $0x18] sm:$0xff]
    %v2070 = vlaneseq
    %v2071 = vshrl.u32 %v2070, 7
    %v2072 = vsub.s32 1, %v2071
    %v2073 = vrot.slane %v44, %v2072
    %v2075 = vsel %vm62, %v2063, 0
    %v2078 = vsel %vm62, %v2064, 0
    %2080 = vmatprep.subr.mxu0 0.0
    %2081 = vmatpush1.msra.mxu0 %v2066
    %2082 = vmatprep.subr.mxu0 0.0
    %2083 = vmatpush1.msra.mxu0 %v2067
    %2084 = vmatprep.subr.mxu0 0.0
    %2085 = vmatpush1.msra.mxu0 %v2068
    %2086 = vmatprep.subr.mxu0 0.0
    %2087 = vmatpush1.msra.mxu0 %v2069
    %2088 = vmatprep.subr.mxu0 0.0
    %2089 = vmatpush1.msra.mxu0 0.0
    %2090 = vmatprep.subr.mxu0 0.0
    %2091 = vmatpush1.msra.mxu0 0.0
    %2092 = vmatprep.subr.mxu0 0.0
    %2093 = vmatpush1.msra.mxu0 0.0
    %2094 = vmatprep.subr.mxu0 0.0
    %2095 = vmatpush1.msra.mxu0 0.0
    %2096 = vmatprep.subr.mxu0 0.0
    %2097 = vmatpush1.msra.mxu0 0.0
    %2098 = vmatprep.subr.mxu0 0.0
    %2099 = vmatpush1.msra.mxu0 0.0
    %2100 = vmatprep.subr.mxu0 0.0
    %2101 = vmatpush1.msra.mxu0 0.0
    %2102 = vmatprep.subr.mxu0 0.0
    %2103 = vmatpush1.msra.mxu0 0.0
    %2104 = vmatprep.subr.mxu0 0.0
    %2105 = vmatpush1.msra.mxu0 0.0
    %2106 = vmatprep.subr.mxu0 0.0
    %2107 = vmatpush1.msra.mxu0 0.0
    %2108 = vmatprep.subr.mxu0 0.0
    %2109 = vmatpush1.msra.mxu0 0.0
    %2110 = vmatprep.subr.mxu0 0.0
    %2111 = vmatpush1.msra.mxu0 0.0
    %2112 = vmatprep.subr.mxu0 0.0
    %2113 = vmatpush1.msra.mxu0 0.0
    %2114 = vmatprep.subr.mxu0 0.0
    %2115 = vmatpush1.msra.mxu0 0.0
    %2116 = vmatprep.subr.mxu0 0.0
    %2117 = vmatpush1.msra.mxu0 0.0
    %2118 = vmatprep.subr.mxu0 0.0
    %2119 = vmatpush1.msra.mxu0 0.0
    %2120 = vmatprep.subr.mxu0 0.0
    %2121 = vmatpush1.msra.mxu0 0.0
    %2122 = vmatprep.subr.mxu0 0.0
    %2123 = vmatpush1.msra.mxu0 0.0
    %2124 = vmatprep.subr.mxu0 0.0
    %2125 = vmatpush1.msra.mxu0 0.0
    %2126 = vmatprep.subr.mxu0 0.0
    %2127 = vmatpush1.msra.mxu0 0.0
    %2128 = vmatprep.subr.mxu0 0.0
    %2129 = vmatpush1.msra.mxu0 0.0
    %2130 = vmatprep.subr.mxu0 0.0
    %2131 = vmatpush1.msra.mxu0 0.0
    %2132 = vmatprep.subr.mxu0 0.0
    %2133 = vmatpush1.msra.mxu0 0.0
    %2134 = vmatprep.subr.mxu0 0.0
    %2135 = vmatpush1.msra.mxu0 0.0
    %2136 = vmatprep.subr.mxu0 0.0
    %2137 = vmatpush1.msra.mxu0 0.0
    %2138 = vmatprep.subr.mxu0 0.0
    %2139 = vmatpush1.msra.mxu0 0.0
    %2140 = vmatprep.subr.mxu0 0.0
    %2141 = vmatpush1.msra.mxu0 0.0
    %2142 = vmatprep.subr.mxu0 0.0
    %2143 = vmatpush1.msra.mxu0 0.0
    %2144 = vmatprep.mubr.f32.mxu0 0.0
    %2145 = vmatmul.mubr.f32.gmra.mrb[0].mxu0 %v2075
    %v2146 = vpop.f32.mrb[0].mxu0
    %v2147 = vadd.f32 %v2073, %v2146
    %v2148 = vpop.f32.mrb[0].mxu0
    %2149 = vmatprep.mubr.f32.mxu0 0.0
    %2150 = vmatmul.mubr.f32.gmra.mrb[0].mxu0 %v2078
    %v2151 = vpop.f32.mrb[0].mxu0
    %v2152 = vadd.f32 %v2073, %v2151
    %v2153 = vpop.f32.mrb[0].mxu0
    %2154 = vdwg.mxu0
    %v2155 = vmax.f32 %v2147, 0.0
    %v2156 = vmax.f32 %v2152, 0.0
    %s2157 = scalar_lea.vmem %s5, 64
    %v2158 = vld [vmem:[%s2157] sm:$0xff]
    %v2159 = vld [vmem:[%s2157 + $0x8] sm:$0xff]
    %v2160 = vld [vmem:[%s2157 + $0x10] sm:$0xff]
    %v2161 = vld [vmem:[%s2157 + $0x18] sm:$0xff]
    %v2162 = vld [vmem:[%s2157 + $0x20] sm:$0xff]
    %v2163 = vld [vmem:[%s2157 + $0x28] sm:$0xff]
    %v2164 = vld [vmem:[%s2157 + $0x30] sm:$0xff]
    %v2165 = vld [vmem:[%s2157 + $0x38] sm:$0xff]
    %v2166 = vlaneseq
    %v2167 = vshrl.u32 %v2166, 7
    %v2168 = vsub.s32 3, %v2167
    %v2169 = vrot.slane %v44, %v2168
    %v2171 = vsel %vm1051, %v2155, 0
    %v2174 = vsel %vm1051, %v2156, 0
    %2176 = vmatprep.subr.mxu0 0.0
    %2177 = vmatpush1.msra.mxu0 %v2158
    %2178 = vmatprep.subr.mxu0 0.0
    %2179 = vmatpush1.msra.mxu0 %v2159
    %2180 = vmatprep.subr.mxu0 0.0
    %2181 = vmatpush1.msra.mxu0 %v2160
    %2182 = vmatprep.subr.mxu0 0.0
    %2183 = vmatpush1.msra.mxu0 %v2161
    %2184 = vmatprep.subr.mxu0 0.0
    %2185 = vmatpush1.msra.mxu0 %v2162
    %2186 = vmatprep.subr.mxu0 0.0
    %2187 = vmatpush1.msra.mxu0 %v2163
    %2188 = vmatprep.subr.mxu0 0.0
    %2189 = vmatpush1.msra.mxu0 %v2164
    %2190 = vmatprep.subr.mxu0 0.0
    %2191 = vmatpush1.msra.mxu0 %v2165
    %2192 = vmatprep.subr.mxu0 0.0
    %2193 = vmatpush1.msra.mxu0 0.0
    %2194 = vmatprep.subr.mxu0 0.0
    %2195 = vmatpush1.msra.mxu0 0.0
    %2196 = vmatprep.subr.mxu0 0.0
    %2197 = vmatpush1.msra.mxu0 0.0
    %2198 = vmatprep.subr.mxu0 0.0
    %2199 = vmatpush1.msra.mxu0 0.0
    %2200 = vmatprep.subr.mxu0 0.0
    %2201 = vmatpush1.msra.mxu0 0.0
    %2202 = vmatprep.subr.mxu0 0.0
    %2203 = vmatpush1.msra.mxu0 0.0
    %2204 = vmatprep.subr.mxu0 0.0
    %2205 = vmatpush1.msra.mxu0 0.0
    %2206 = vmatprep.subr.mxu0 0.0
    %2207 = vmatpush1.msra.mxu0 0.0
    %2208 = vmatprep.subr.mxu0 0.0
    %2209 = vmatpush1.msra.mxu0 0.0
    %2210 = vmatprep.subr.mxu0 0.0
    %2211 = vmatpush1.msra.mxu0 0.0
    %2212 = vmatprep.subr.mxu0 0.0
    %2213 = vmatpush1.msra.mxu0 0.0
    %2214 = vmatprep.subr.mxu0 0.0
    %2215 = vmatpush1.msra.mxu0 0.0
    %2216 = vmatprep.subr.mxu0 0.0
    %2217 = vmatpush1.msra.mxu0 0.0
    %2218 = vmatprep.subr.mxu0 0.0
    %2219 = vmatpush1.msra.mxu0 0.0
    %2220 = vmatprep.subr.mxu0 0.0
    %2221 = vmatpush1.msra.mxu0 0.0
    %2222 = vmatprep.subr.mxu0 0.0
    %2223 = vmatpush1.msra.mxu0 0.0
    %2224 = vmatprep.subr.mxu0 0.0
    %2225 = vmatpush1.msra.mxu0 0.0
    %2226 = vmatprep.subr.mxu0 0.0
    %2227 = vmatpush1.msra.mxu0 0.0
    %2228 = vmatprep.subr.mxu0 0.0
    %2229 = vmatpush1.msra.mxu0 0.0
    %2230 = vmatprep.subr.mxu0 0.0
    %2231 = vmatpush1.msra.mxu0 0.0
    %2232 = vmatprep.subr.mxu0 0.0
    %2233 = vmatpush1.msra.mxu0 0.0
    %2234 = vmatprep.subr.mxu0 0.0
    %2235 = vmatpush1.msra.mxu0 0.0
    %2236 = vmatprep.subr.mxu0 0.0
    %2237 = vmatpush1.msra.mxu0 0.0
    %2238 = vmatprep.subr.mxu0 0.0
    %2239 = vmatpush1.msra.mxu0 0.0
    %2240 = vmatprep.mubr.f32.mxu0 0.0
    %2241 = vmatmul.mubr.f32.gmra.mrb[0].mxu0 %v2171
    %v2242 = vpop.f32.mrb[0].mxu0
    %v2243 = vadd.f32 %v2169, %v2242
    %v2244 = vpop.f32.mrb[0].mxu0
    %2245 = vmatprep.mubr.f32.mxu0 0.0
    %2246 = vmatmul.mubr.f32.gmra.mrb[0].mxu0 %v2174
    %v2247 = vpop.f32.mrb[0].mxu0
    %v2248 = vadd.f32 %v2169, %v2247
    %v2249 = vpop.f32.mrb[0].mxu0
    %2250 = vdwg.mxu0
    %v2251 = vadd.f32 %v2063, %v2243
    %v2252 = vadd.f32 %v2064, %v2248
    %v2253 = vsel %vm62, %v2251, 0.0
    %2254 = vadd.xlane.f32.xlu0 %v2253
    %v2255 = vpop.xlane.xlu0 %2254
    %v2256 = vsel %vm62, %v2252, 0.0
    %2257 = vadd.xlane.f32.xlu0 %v2256
    %v2258 = vpop.xlane.xlu0 %2257
    %v2259 = vmul.f32 %v2255, %v915
    %v2260 = vmul.f32 %v2258, %v915
    %v2261 = vsub.f32 %v2251, %v2259
    %v2262 = vsub.f32 %v2252, %v2260
    %v2263 = vmul.f32 %v2261, %v2261
    %v2264 = vmul.f32 %v2262, %v2262
    %v2265 = vsel %vm62, %v2263, 0.0
    %2266 = vadd.xlane.f32.xlu0 %v2265
    %v2267 = vpop.xlane.xlu0 %2266
    %v2268 = vsel %vm62, %v2264, 0.0
    %2269 = vadd.xlane.f32.xlu0 %v2268
    %v2270 = vpop.xlane.xlu0 %2269
    %v2271 = vmul.f32 %v2267, %v915
    %v2272 = vmul.f32 %v2270, %v915
    %v2273 = vadd.f32 %v2271, 1e-05
    %v2274 = vadd.f32 %v2272, 1e-05
    %v2275 = vrsqrt.pop %v2273
    %v2276 = vrsqrt.pop %v2274
    %v2277 = vmul.f32 %v2261, %v2275
    %v2278 = vmul.f32 %v2262, %v2276
    %v2279 = vlaneseq
    %v2280 = vshrl.u32 %v2279, 7
    %v2281 = vsub.s32 6, %v2280
    %v2282 = vrot.slane %v44, %v2281
    %v2283 = vmul.f32 %v2277, %v2282
    %v2284 = vmul.f32 %v2278, %v2282
    %v2285 = vlaneseq
    %v2286 = vshrl.u32 %v2285, 7
    %v2287 = vsub.s32 7, %v2286
    %v2288 = vrot.slane %v44, %v2287
    %v2289 = vadd.f32 %v2283, %v2288
    %v2290 = vadd.f32 %v2284, %v2288
    %2291 = vst.msk [vmem:[#allocation5] sm:$0xff] %vm62, %v2289
    %2292 = vst.msk [vmem:[#allocation5 + $0x8] sm:$0xff] %vm62, %v2290
    // Predicated region
    $region34: #{tpu_custom_call.1} parent=1 // pred_check
      _
    $region35: #{tpu_custom_call.1} parent=1 // pred_check_branch
      %2294 = sbr.rel (0) target = $region37
    $region36: #{tpu_custom_call.1} parent=1 // pred_region
      %s2296 = ssub.s32 256, 256
      %2297 = vsyncadd [#allocation4], %s2296
      %s2298 = sshll.u32 [#allocation5], 4
      %s2299 = int_to_ptr.vmem [resolvable:$true] %s2298
      %2304 = dma.vmem_to_hbm [thread:$0]  %s2299, 256, %s7, [#allocation4], 128, 128, 8
    $region37: #{tpu_custom_call.1} parent=1 // pred_fallthru
      _
    // Predicated region
    $region38: #{tpu_custom_call.1} parent=1 // pred_check
      _
    $region39: #{tpu_custom_call.1} parent=1 // pred_check_branch
      %2306 = sbr.rel (0) target = $region41
    $region40: #{tpu_custom_call.1} parent=1 // pred_region
      %2307 = dma.done [#allocation4], 256
    $region41: #{tpu_custom_call.1} parent=1 // pred_fallthru
      _
    %2308 = vsyncpa [#allocation3], 1
    %2309 = vsyncpa [#allocation4], 1

</llo_original>
